<compile_context>
chip_gen: v7x
topology: tpu7x:2x2x1
jax: 0.10.0
libtpu: 0.0.40
codegen_flags: <defaults>
</compile_context>

<pallas_src>
import jax
import jax.numpy as jnp
from jax.experimental import pallas as pl
from jax.experimental.pallas import tpu as pltpu


def _round_up(x, m):
    return ((x + m - 1) // m) * m


def _cdiv(a, b):
    return (a + b - 1) // b


_TM_MAX = 2048   # bf16 rows per grid step; keeps double-buffered tiles inside
                 # v5e's 16 MiB default scoped VMEM without any override.


def _choose_tm(m, tmax=_TM_MAX):
    """Tile rows: multiple of 16 (bf16 sublanes); >=2 grid steps when it pays."""
    mp = _round_up(m, 16)
    if mp <= 32:
        return mp
    # at least 2 steps so the "parallel" axis can shard across v7x's 2 TCs
    return min(tmax, _round_up((mp + 1) // 2, 16))


# ----------------------------------------------------------------------------
# Pallas kernels
# ----------------------------------------------------------------------------
def _conv_block_kernel(x_ref, w_ref, b_ref, shift_ref, o_ref):
    """out = LeakyReLU(rows @ W_folded + b*scale) + shift  (BN scale folded)."""
    y = jnp.dot(x_ref[...], w_ref[...], preferred_element_type=jnp.float32)
    y = y + b_ref[...]                        # (1, OW*Cout) broadcast
    y = jnp.where(y > 0, y, 0.2 * y)          # LeakyReLU(0.2)
    o_ref[...] = (y + shift_ref[...]).astype(o_ref.dtype)   # bf16, lane-dense


def _heads_kernel(x_ref, w_ref, b_ref, o_ref):
    """Fused heads: one 128-lane matmul; col 0 = sigmoid, cols 1..10 = softmax."""
    y = jnp.dot(x_ref[...], w_ref[...], preferred_element_type=jnp.float32)
    y = y + b_ref[...]                                       # (TB, 128) f32
    col = jax.lax.broadcasted_iota(jnp.int32, y.shape, 1)
    aux_mask = jnp.logical_and(col >= 1, col < 11)
    # sigmoid: reciprocal on the EUP slot (clamped so col 0 stays in [0, 1])
    sig = jnp.clip(pl.reciprocal(1.0 + jnp.exp(-y), approx=True), 0.0, 1.0)
    # numerically-stable masked softmax over columns 1..10, exact divide
    a = jnp.where(aux_mask, y, -1e30)
    m = jnp.max(a, axis=-1, keepdims=True)
    e = jnp.exp(a - m)                                       # masked cols -> 0
    denom = jnp.sum(e, axis=-1, keepdims=True)
    soft = e / denom                                         # exact: sum == 1
    o_ref[...] = jnp.where(col == 0, sig, jnp.where(aux_mask, soft, 0.0))


# ----------------------------------------------------------------------------
# Wrappers
# ----------------------------------------------------------------------------
def conv_block(x, w, b, bn_scale, bn_shift):
    """x: (B, H, W, Cin) NHWC bf16; w: (Cout, Cin, 3, 3); stride 2, pad 1."""
    B, H, W, Cin = x.shape
    Cout = w.shape[0]
    OH, OW = H // 2, W // 2
    K = 3 * W * Cin            # (kh, wi, ci)
    N = OW * Cout              # (ow, co)  -> lane-dense (256 every block)

    # ---- host glue: H-parity row restack only (no 9x patch matrix) ---------
    xp = jnp.pad(x, ((0, 0), (1, 0), (0, 0), (0, 0)))          # 1 zero row on top
    rows = jnp.stack([xp[:, kh:kh + 2 * OH:2] for kh in range(3)], axis=2)
    x_mat = rows.reshape(B * OH, K)                            # bf16, (M, K)

    # ---- fold kw taps, W-padding, stride-2 over W and BN scale into W ------
    w_r = jnp.transpose(w, (2, 3, 1, 0)).astype(jnp.float32)   # (KH, KW, Cin, Cout)
    wi = jnp.arange(W)[None, :, None]
    ow = jnp.arange(OW)[None, None, :]
    kw = jnp.arange(3)[:, None, None]
    sel = (wi == 2 * ow + kw - 1).astype(jnp.float32)          # (KW, W, OW)
    w_big = jnp.einsum("auo,hacd->hucod", sel, w_r)            # (KH, W, Cin, OW, Cout)
    w_big = (w_big * bn_scale[None, None, None, None, :]).reshape(K, N)
    w_big = w_big.astype(jnp.bfloat16)
    b_vec = jnp.tile(b * bn_scale, OW).reshape(1, N).astype(jnp.float32)
    s_vec = jnp.tile(bn_shift, OW).reshape(1, N).astype(jnp.float32)

    M = B * OH
    TM = _choose_tm(M)
    n_steps = _cdiv(M, TM)
    Mp = n_steps * TM
    if Mp != M:
        x_mat = jnp.pad(x_mat, ((0, Mp - M), (0, 0)))

    y = pl.pallas_call(
        _conv_block_kernel,
        out_shape=jax.ShapeDtypeStruct((Mp, N), jnp.bfloat16),
        grid=(n_steps,),
        in_specs=[
            pl.BlockSpec((TM, K), lambda i: (i, 0)),    # input rows (pipelined)
            pl.BlockSpec((K, N), lambda i: (0, 0)),     # folded weight resident
            pl.BlockSpec((1, N), lambda i: (0, 0)),     # bias resident
            pl.BlockSpec((1, N), lambda i: (0, 0)),     # BN shift resident
        ],
        out_specs=pl.BlockSpec((TM, N), lambda i: (i, 0)),
        compiler_params=pltpu.CompilerParams(
            dimension_semantics=("parallel",)),
    )(x_mat, w_big, b_vec, s_vec)

    return y[:M].reshape(B, OH, OW, Cout)                      # stays NHWC bf16


def discriminator_forward(img, params):
    """img: (B, 3, 32, 32) NCHW float32 -> (validity (B, 1), label (B, 10))."""
    x = jnp.transpose(img, (0, 2, 3, 1)).astype(jnp.bfloat16)  # NCHW->NHWC once
    for blk in params["blocks"]:
        x = conv_block(x, blk["w"], blk["b"], blk["bn_scale"], blk["bn_shift"])

    B, Hs, Ws, C = x.shape
    feat = Hs * Ws * C                                         # 2*2*128 = 512
    flat = x.reshape(B, feat)                                  # (h, w, c) order, bf16

    # PyTorch flattens NCHW -> (c, h, w); permute the tiny head-weight columns
    # once at trace time instead of transposing the activation.
    def reorder(wmat):                                         # (out, feat) c-major -> hwc
        return wmat.reshape(-1, C, Hs, Ws).transpose(0, 2, 3, 1).reshape(-1, feat)

    adv_w = reorder(params["adv_w"])                           # (1, 512)
    aux_w = reorder(params["aux_w"])                           # (10, 512)

    # Fused, lane-padded head weights: output columns = [adv, aux0..aux9, 0-pad].
    w_heads = jnp.concatenate([adv_w, aux_w], axis=0).T        # (512, 11)
    w_heads = jnp.pad(w_heads, ((0, 0), (0, 128 - 11))).astype(jnp.bfloat16)
    b_heads = jnp.concatenate([params["adv_b"], params["aux_b"]])
    b_heads = jnp.pad(b_heads, (0, 128 - 11)).reshape(1, 128).astype(jnp.float32)

    TB = _choose_tm(B, 2048)
    n_steps = _cdiv(B, TB)
    Bp = n_steps * TB
    xf = flat if Bp == B else jnp.pad(flat, ((0, Bp - B), (0, 0)))

    heads = pl.pallas_call(
        _heads_kernel,
        out_shape=jax.ShapeDtypeStruct((Bp, 128), jnp.float32),
        grid=(n_steps,),
        in_specs=[
            pl.BlockSpec((TB, feat), lambda i: (i, 0)),
            pl.BlockSpec((feat, 128), lambda i: (0, 0)),
            pl.BlockSpec((1, 128), lambda i: (0, 0)),
        ],
        out_specs=pl.BlockSpec((TB, 128), lambda i: (i, 0)),
        compiler_params=pltpu.CompilerParams(
            dimension_semantics=("parallel",)),
    )(xf, w_heads, b_heads)

    validity = heads[:B, 0:1]
    label = heads[:B, 1:11]
    return validity, label


# ----------------------------------------------------------------------------
# Deterministic parameter construction (matches nn.Module shapes)
# ----------------------------------------------------------------------------
def init_params(key):
    channels = [(3, 16, False), (16, 32, True), (32, 64, True), (64, 128, True)]
    bn_eps = 0.8  # nn.BatchNorm2d(out_filters, 0.8) -> eps = 0.8
    blocks = []
    for cin, cout, use_bn in channels:
        key, kw, kb = jax.random.split(key, 3)
        w = 0.05 * jax.random.normal(kw, (cout, cin, 3, 3), jnp.float32)
        b = 0.05 * jax.random.normal(kb, (cout,), jnp.float32)
        if use_bn:
            gamma = jnp.ones((cout,), jnp.float32)
            beta = jnp.zeros((cout,), jnp.float32)
            run_mean = jnp.zeros((cout,), jnp.float32)
            run_var = jnp.ones((cout,), jnp.float32)
            scale = gamma / jnp.sqrt(run_var + bn_eps)   # > 0: fold commutes w/ LeakyReLU
            shift = beta - run_mean * scale
        else:
            scale = jnp.ones((cout,), jnp.float32)
            shift = jnp.zeros((cout,), jnp.float32)
        blocks.append(dict(w=w, b=b, bn_scale=scale, bn_shift=shift))

    ds_size = 32 // 2 ** 4           # = 2
    feat = 128 * ds_size ** 2        # = 512
    key, k1, k2, k3, k4 = jax.random.split(key, 5)
    adv_w = 0.05 * jax.random.normal(k1, (1, feat), jnp.float32)    # Linear(512, 1)
    adv_b = 0.05 * jax.random.normal(k2, (1,), jnp.float32)
    aux_w = 0.05 * jax.random.normal(k3, (10, feat), jnp.float32)   # Linear(512, 10)
    aux_b = 0.05 * jax.random.normal(k4, (10,), jnp.float32)
    return dict(blocks=blocks, adv_w=adv_w, adv_b=adv_b, aux_w=aux_w, aux_b=aux_b)


# ----------------------------------------------------------------------------
if __name__ == "__main__":
    key = jax.random.PRNGKey(0)
    key, kimg, kparam = jax.random.split(key, 3)

    B = 2
    img = jax.random.normal(kimg, (B, 3, 32, 32), jnp.float32)   # NCHW like PyTorch
    params = init_params(kparam)

    validity, label = jax.jit(discriminator_forward)(img, params)
    validity = jax.block_until_ready(validity)
    label = jax.block_until_ready(label)

    assert validity.shape == (B, 1) and label.shape == (B, 10)
    assert bool(jnp.all(jnp.isfinite(validity))) and bool(jnp.all(jnp.isfinite(label)))
    assert bool(jnp.all((validity >= 0.0) & (validity <= 1.0)))
    assert bool(jnp.all((label >= 0.0) & (label <= 1.0)))
    # exact softmax divide -> sum-to-1 at f32 precision (bf16 only feeds the MXU)
    assert bool(jnp.allclose(jnp.sum(label, axis=1), 1.0, atol=1e-3))
    print("KERNEL_OK")
</pallas_src>

<mosaic_0001>
module attributes {stable_mosaic.version = 11 : i64} {
  func.func @_conv_block_kernel(%arg0: i32, %arg1: memref<32x288xbf16, #tpu.memory_space<vmem>>, %arg2: memref<288x256xbf16, #tpu.memory_space<vmem>>, %arg3: memref<1x256xf32, #tpu.memory_space<vmem>>, %arg4: memref<1x256xf32, #tpu.memory_space<vmem>>, %arg5: memref<32x256xbf16, #tpu.memory_space<vmem>>) attributes {dimension_semantics = [#tpu.dimension_semantics<parallel>], iteration_bounds = array<i64: 1>, scalar_prefetch = 0 : i64, scratch_operands = 0 : i64, tpu.core_type = #tpu.core_type<tc>, window_params = [{transform_indices = @transform_0, window_bounds = array<i64: 32, 288>}, {pipeline_mode = #tpu.pipeline_mode<synchronous>, transform_indices = @transform_1, window_bounds = array<i64: 288, 256>}, {pipeline_mode = #tpu.pipeline_mode<synchronous>, transform_indices = @transform_2, window_bounds = array<i64: 1, 256>}, {pipeline_mode = #tpu.pipeline_mode<synchronous>, transform_indices = @transform_3, window_bounds = array<i64: 1, 256>}, {transform_indices = @transform_4, window_bounds = array<i64: 32, 256>}]} {
    %c0 = arith.constant 0 : index
    %c0_0 = arith.constant 0 : index
    %0 = vector.load %arg1[%c0, %c0_0] : memref<32x288xbf16, #tpu.memory_space<vmem>>, vector<32x288xbf16>
    %c0_1 = arith.constant 0 : index
    %c0_2 = arith.constant 0 : index
    %1 = vector.load %arg2[%c0_1, %c0_2] : memref<288x256xbf16, #tpu.memory_space<vmem>>, vector<288x256xbf16>
    %cst = arith.constant dense<0.000000e+00> : vector<32x256xf32>
    %2 = tpu.matmul %0, %1, %cst {dimension_numbers = #tpu.dot_dimension_numbers<[1], [0], [0], [1], [0, 0, 1, 1], [], []>} : vector<32x288xbf16>, vector<288x256xbf16>, vector<32x256xf32> -> vector<32x256xf32>
    %c0_3 = arith.constant 0 : index
    %c0_4 = arith.constant 0 : index
    %3 = vector.load %arg3[%c0_3, %c0_4] : memref<1x256xf32, #tpu.memory_space<vmem>>, vector<1x256xf32>
    %4 = vector.broadcast %3 : vector<1x256xf32> to vector<32x256xf32>
    %5 = arith.addf %2, %4 : vector<32x256xf32>
    %cst_5 = arith.constant 0.000000e+00 : f32
    %6 = vector.broadcast %cst_5 : f32 to vector<32x256xf32>
    %7 = arith.cmpf ogt, %5, %6 : vector<32x256xf32>
    %cst_6 = arith.constant 2.000000e-01 : f32
    %8 = vector.broadcast %cst_6 : f32 to vector<32x256xf32>
    %9 = arith.mulf %8, %5 : vector<32x256xf32>
    %10 = arith.select %7, %5, %9 : vector<32x256xi1>, vector<32x256xf32>
    %c0_7 = arith.constant 0 : index
    %c0_8 = arith.constant 0 : index
    %11 = vector.load %arg4[%c0_7, %c0_8] : memref<1x256xf32, #tpu.memory_space<vmem>>, vector<1x256xf32>
    %12 = vector.broadcast %11 : vector<1x256xf32> to vector<32x256xf32>
    %13 = arith.addf %10, %12 : vector<32x256xf32>
    %14 = arith.truncf %13 : vector<32x256xf32> to vector<32x256xbf16>
    %c0_9 = arith.constant 0 : index
    %c0_10 = arith.constant 0 : index
    %15 = vector.load %arg5[%c0_9, %c0_10] : memref<32x256xbf16, #tpu.memory_space<vmem>>, vector<32x256xbf16>
    tpu.vector_store %arg5[%c0_9, %c0_10], %14 {strides = array<i32>} : memref<32x256xbf16, #tpu.memory_space<vmem>>, vector<32x256xbf16>,
    return
  }
  func.func @transform_0(%arg0: i32) -> (i32, i32) {
    %c0_i32 = arith.constant 0 : i32
    %c0_i32_0 = arith.constant 0 : i32
    return %arg0, %c0_i32 : i32, i32
  }
  func.func @transform_1(%arg0: i32) -> (i32, i32) {
    %c0_i32 = arith.constant 0 : i32
    %c0_i32_0 = arith.constant 0 : i32
    %c0_i32_1 = arith.constant 0 : i32
    return %c0_i32, %c0_i32_0 : i32, i32
  }
  func.func @transform_2(%arg0: i32) -> (i32, i32) {
    %c0_i32 = arith.constant 0 : i32
    %c0_i32_0 = arith.constant 0 : i32
    %c0_i32_1 = arith.constant 0 : i32
    return %c0_i32, %c0_i32_0 : i32, i32
  }
  func.func @transform_3(%arg0: i32) -> (i32, i32) {
    %c0_i32 = arith.constant 0 : i32
    %c0_i32_0 = arith.constant 0 : i32
    %c0_i32_1 = arith.constant 0 : i32
    return %c0_i32, %c0_i32_0 : i32, i32
  }
  func.func @transform_4(%arg0: i32) -> (i32, i32) {
    %c0_i32 = arith.constant 0 : i32
    %c0_i32_0 = arith.constant 0 : i32
    return %arg0, %c0_i32 : i32, i32
  }
}

module attributes {stable_mosaic.version = 11 : i64} {
  func.func @_conv_block_kernel(%arg0: i32, %arg1: memref<16x768xbf16, #tpu.memory_space<vmem>>, %arg2: memref<768x256xbf16, #tpu.memory_space<vmem>>, %arg3: memref<1x256xf32, #tpu.memory_space<vmem>>, %arg4: memref<1x256xf32, #tpu.memory_space<vmem>>, %arg5: memref<16x256xbf16, #tpu.memory_space<vmem>>) attributes {dimension_semantics = [#tpu.dimension_semantics<parallel>], iteration_bounds = array<i64: 1>, scalar_prefetch = 0 : i64, scratch_operands = 0 : i64, tpu.core_type = #tpu.core_type<tc>, window_params = [{transform_indices = @transform_0, window_bounds = array<i64: 16, 768>}, {pipeline_mode = #tpu.pipeline_mode<synchronous>, transform_indices = @transform_1, window_bounds = array<i64: 768, 256>}, {pipeline_mode = #tpu.pipeline_mode<synchronous>, transform_indices = @transform_2, window_bounds = array<i64: 1, 256>}, {pipeline_mode = #tpu.pipeline_mode<synchronous>, transform_indices = @transform_3, window_bounds = array<i64: 1, 256>}, {transform_indices = @transform_4, window_bounds = array<i64: 16, 256>}]} {
    %c0 = arith.constant 0 : index
    %c0_0 = arith.constant 0 : index
    %0 = vector.load %arg1[%c0, %c0_0] : memref<16x768xbf16, #tpu.memory_space<vmem>>, vector<16x768xbf16>
    %c0_1 = arith.constant 0 : index
    %c0_2 = arith.constant 0 : index
    %1 = vector.load %arg2[%c0_1, %c0_2] : memref<768x256xbf16, #tpu.memory_space<vmem>>, vector<768x256xbf16>
    %cst = arith.constant dense<0.000000e+00> : vector<16x256xf32>
    %2 = tpu.matmul %0, %1, %cst {dimension_numbers = #tpu.dot_dimension_numbers<[1], [0], [0], [1], [0, 0, 1, 1], [], []>} : vector<16x768xbf16>, vector<768x256xbf16>, vector<16x256xf32> -> vector<16x256xf32>
    %c0_3 = arith.constant 0 : index
    %c0_4 = arith.constant 0 : index
    %3 = vector.load %arg3[%c0_3, %c0_4] : memref<1x256xf32, #tpu.memory_space<vmem>>, vector<1x256xf32>
    %4 = vector.broadcast %3 : vector<1x256xf32> to vector<16x256xf32>
    %5 = arith.addf %2, %4 : vector<16x256xf32>
    %cst_5 = arith.constant 0.000000e+00 : f32
    %6 = vector.broadcast %cst_5 : f32 to vector<16x256xf32>
    %7 = arith.cmpf ogt, %5, %6 : vector<16x256xf32>
    %cst_6 = arith.constant 2.000000e-01 : f32
    %8 = vector.broadcast %cst_6 : f32 to vector<16x256xf32>
    %9 = arith.mulf %8, %5 : vector<16x256xf32>
    %10 = arith.select %7, %5, %9 : vector<16x256xi1>, vector<16x256xf32>
    %c0_7 = arith.constant 0 : index
    %c0_8 = arith.constant 0 : index
    %11 = vector.load %arg4[%c0_7, %c0_8] : memref<1x256xf32, #tpu.memory_space<vmem>>, vector<1x256xf32>
    %12 = vector.broadcast %11 : vector<1x256xf32> to vector<16x256xf32>
    %13 = arith.addf %10, %12 : vector<16x256xf32>
    %14 = arith.truncf %13 : vector<16x256xf32> to vector<16x256xbf16>
    %c0_9 = arith.constant 0 : index
    %c0_10 = arith.constant 0 : index
    %15 = vector.load %arg5[%c0_9, %c0_10] : memref<16x256xbf16, #tpu.memory_space<vmem>>, vector<16x256xbf16>
    tpu.vector_store %arg5[%c0_9, %c0_10], %14 {strides = array<i32>} : memref<16x256xbf16, #tpu.memory_space<vmem>>, vector<16x256xbf16>,
    return
  }
  func.func @transform_0(%arg0: i32) -> (i32, i32) {
    %c0_i32 = arith.constant 0 : i32
    %c0_i32_0 = arith.constant 0 : i32
    return %arg0, %c0_i32 : i32, i32
  }
  func.func @transform_1(%arg0: i32) -> (i32, i32) {
    %c0_i32 = arith.constant 0 : i32
    %c0_i32_0 = arith.constant 0 : i32
    %c0_i32_1 = arith.constant 0 : i32
    return %c0_i32, %c0_i32_0 : i32, i32
  }
  func.func @transform_2(%arg0: i32) -> (i32, i32) {
    %c0_i32 = arith.constant 0 : i32
    %c0_i32_0 = arith.constant 0 : i32
    %c0_i32_1 = arith.constant 0 : i32
    return %c0_i32, %c0_i32_0 : i32, i32
  }
  func.func @transform_3(%arg0: i32) -> (i32, i32) {
    %c0_i32 = arith.constant 0 : i32
    %c0_i32_0 = arith.constant 0 : i32
    %c0_i32_1 = arith.constant 0 : i32
    return %c0_i32, %c0_i32_0 : i32, i32
  }
  func.func @transform_4(%arg0: i32) -> (i32, i32) {
    %c0_i32 = arith.constant 0 : i32
    %c0_i32_0 = arith.constant 0 : i32
    return %arg0, %c0_i32 : i32, i32
  }
}

module attributes {stable_mosaic.version = 11 : i64} {
  func.func @_heads_kernel(%arg0: i32, %arg1: memref<16x512xbf16, #tpu.memory_space<vmem>>, %arg2: memref<512x128xbf16, #tpu.memory_space<vmem>>, %arg3: memref<1x128xf32, #tpu.memory_space<vmem>>, %arg4: memref<16x128xf32, #tpu.memory_space<vmem>>) attributes {dimension_semantics = [#tpu.dimension_semantics<parallel>], iteration_bounds = array<i64: 1>, scalar_prefetch = 0 : i64, scratch_operands = 0 : i64, tpu.core_type = #tpu.core_type<tc>, window_params = [{transform_indices = @transform_0, window_bounds = array<i64: 16, 512>}, {pipeline_mode = #tpu.pipeline_mode<synchronous>, transform_indices = @transform_1, window_bounds = array<i64: 512, 128>}, {pipeline_mode = #tpu.pipeline_mode<synchronous>, transform_indices = @transform_2, window_bounds = array<i64: 1, 128>}, {transform_indices = @transform_3, window_bounds = array<i64: 16, 128>}]} {
    %c0 = arith.constant 0 : index
    %c0_0 = arith.constant 0 : index
    %0 = vector.load %arg1[%c0, %c0_0] : memref<16x512xbf16, #tpu.memory_space<vmem>>, vector<16x512xbf16>
    %c0_1 = arith.constant 0 : index
    %c0_2 = arith.constant 0 : index
    %1 = vector.load %arg2[%c0_1, %c0_2] : memref<512x128xbf16, #tpu.memory_space<vmem>>, vector<512x128xbf16>
    %cst = arith.constant dense<0.000000e+00> : vector<16x128xf32>
    %2 = tpu.matmul %0, %1, %cst {dimension_numbers = #tpu.dot_dimension_numbers<[1], [0], [0], [1], [0, 0, 1, 1], [], []>} : vector<16x512xbf16>, vector<512x128xbf16>, vector<16x128xf32> -> vector<16x128xf32>
    %c0_3 = arith.constant 0 : index
    %c0_4 = arith.constant 0 : index
    %3 = vector.load %arg3[%c0_3, %c0_4] : memref<1x128xf32, #tpu.memory_space<vmem>>, vector<1x128xf32>
    %4 = vector.broadcast %3 : vector<1x128xf32> to vector<16x128xf32>
    %5 = arith.addf %2, %4 : vector<16x128xf32>
    %6 = tpu.iota {dimensions = array<i32: 1>} : vector<16x128xi32>
    %c1_i32 = arith.constant 1 : i32
    %7 = vector.broadcast %c1_i32 : i32 to vector<16x128xi32>
    %8 = arith.cmpi sge, %6, %7 : vector<16x128xi32>
    %c11_i32 = arith.constant 11 : i32
    %9 = vector.broadcast %c11_i32 : i32 to vector<16x128xi32>
    %10 = arith.cmpi slt, %6, %9 : vector<16x128xi32>
    %11 = arith.andi %8, %10 : vector<16x128xi1>
    %cst_5 = arith.constant 0.000000e+00 : f32
    %12 = vector.broadcast %cst_5 : f32 to vector<16x128xf32>
    %13 = arith.subf %12, %5 : vector<16x128xf32>
    %14 = math.exp %13 : vector<16x128xf32>
    %cst_6 = arith.constant 1.000000e+00 : f32
    %15 = vector.broadcast %cst_6 : f32 to vector<16x128xf32>
    %16 = arith.addf %15, %14 : vector<16x128xf32>
    %17 = tpu.reciprocal %16 {approx = true} : vector<16x128xf32> -> vector<16x128xf32>
    %cst_7 = arith.constant 0.000000e+00 : f32
    %cst_8 = arith.constant 1.000000e+00 : f32
    %18 = vector.broadcast %cst_7 : f32 to vector<16x128xf32>
    %19 = arith.maximumf %18, %17 : vector<16x128xf32>
    %20 = vector.broadcast %cst_8 : f32 to vector<16x128xf32>
    %21 = arith.minimumf %20, %19 : vector<16x128xf32>
    %cst_9 = arith.constant -1.000000e+30 : f32
    %22 = vector.broadcast %cst_9 : f32 to vector<16x128xf32>
    %23 = arith.select %11, %5, %22 : vector<16x128xi1>, vector<16x128xf32>
    %cst_10 = arith.constant dense<0xFF800000> : vector<16xf32>
    %24 = vector.multi_reduction <maximumf>, %23, %cst_10 [1] : vector<16x128xf32> to vector<16xf32>
    %25 = vector.shape_cast %24 : vector<16xf32> to vector<16x1xf32>
    %26 = vector.broadcast %25 : vector<16x1xf32> to vector<16x128xf32>
    %27 = arith.subf %23, %26 : vector<16x128xf32>
    %28 = math.exp %27 : vector<16x128xf32>
    %cst_11 = arith.constant dense<0.000000e+00> : vector<16xf32>
    %29 = vector.multi_reduction <add>, %28, %cst_11 [1] : vector<16x128xf32> to vector<16xf32>
    %30 = vector.shape_cast %29 : vector<16xf32> to vector<16x1xf32>
    %31 = vector.broadcast %30 : vector<16x1xf32> to vector<16x128xf32>
    %32 = arith.divf %28, %31 : vector<16x128xf32>
    %c0_i32 = arith.constant 0 : i32
    %33 = vector.broadcast %c0_i32 : i32 to vector<16x128xi32>
    %34 = arith.cmpi eq, %6, %33 : vector<16x128xi32>
    %cst_12 = arith.constant 0.000000e+00 : f32
    %35 = vector.broadcast %cst_12 : f32 to vector<16x128xf32>
    %36 = arith.select %11, %32, %35 : vector<16x128xi1>, vector<16x128xf32>
    %37 = arith.select %34, %21, %36 : vector<16x128xi1>, vector<16x128xf32>
    %c0_13 = arith.constant 0 : index
    %c0_14 = arith.constant 0 : index
    %38 = vector.load %arg4[%c0_13, %c0_14] : memref<16x128xf32, #tpu.memory_space<vmem>>, vector<16x128xf32>
    tpu.vector_store %arg4[%c0_13, %c0_14], %37 {strides = array<i32>} : memref<16x128xf32, #tpu.memory_space<vmem>>, vector<16x128xf32>,
    return
  }
  func.func @transform_0(%arg0: i32) -> (i32, i32) {
    %c0_i32 = arith.constant 0 : i32
    %c0_i32_0 = arith.constant 0 : i32
    return %arg0, %c0_i32 : i32, i32
  }
  func.func @transform_1(%arg0: i32) -> (i32, i32) {
    %c0_i32 = arith.constant 0 : i32
    %c0_i32_0 = arith.constant 0 : i32
    %c0_i32_1 = arith.constant 0 : i32
    return %c0_i32, %c0_i32_0 : i32, i32
  }
  func.func @transform_2(%arg0: i32) -> (i32, i32) {
    %c0_i32 = arith.constant 0 : i32
    %c0_i32_0 = arith.constant 0 : i32
    %c0_i32_1 = arith.constant 0 : i32
    return %c0_i32, %c0_i32_0 : i32, i32
  }
  func.func @transform_3(%arg0: i32) -> (i32, i32) {
    %c0_i32 = arith.constant 0 : i32
    %c0_i32_0 = arith.constant 0 : i32
    return %arg0, %c0_i32 : i32, i32
  }
}

</mosaic_0001>

<llo_original>
// kernel: mul.29
$region0: #{mul.29}
  #allocation0 [shape = 's32[1]{0}', space=sflag, size = 0x4, scoped, tag = 'scoped memory for mul.29']
  %s0 = inlined_call_operand.vmem [shape: f32[16], index: 0, kind: input, shape index: {}]
  %s1 = inlined_call_operand.vmem [shape: f32[16], index: 1, kind: input, shape index: {}]
  %s2 = inlined_call_operand.vmem [shape: f32[16], index: 2, kind: output, shape index: {}]
  %v3 = vld [vmem:[%s0] sm:$0x1]
  %v4 = vld [vmem:[%s1] sm:$0x1]
  %5 = xla_tuple %v3, %v4
  %6 = xla_tuple %5
  %v7 = vmul.f32 %v3, %v4
  %8 = xla_tuple %v7
  %9 = vst [vmem:[%s2] sm:$0x1] %v7

// kernel: tile.43
$region0: #{tile.43}
  #allocation0 [shape = 's32[1]{0}', space=sflag, size = 0x4, scoped, tag = 'scoped memory for tile.43']
  %s0 = inlined_call_operand.vmem [shape: f32[16], index: 0, kind: input, shape index: {}]
  %s1 = inlined_call_operand.vmem [shape: f32[16,16], index: 1, kind: output, shape index: {}]
  // Predicated region
  $region2: #{tile.43} parent=0 // pred_check
    _
  $region3: #{tile.43} parent=0 // pred_check_branch
    %3 = sbr.rel (0) target = $region5
  $region4: #{tile.43} parent=0 // pred_region
    _
  $region5: #{tile.43} parent=0 // pred_fallthru
    _
  %v4 = vld [vmem:[%s0] ss:$0 sm:$0xff]
  %5 = vst [vmem:[%s1] sm:$0xff] %v4
  %s6 = scalar_lea.vmem %s1, 8
  %7 = vst [vmem:[%s6] sm:$0xff] %v4

// kernel: tile.44
$region0: #{tile.44}
  %s0 = inlined_call_operand.vmem [shape: f32[16,16], index: 0, kind: input, shape index: {}]
  %s1 = inlined_call_operand.vmem [shape: f32[1,256], index: 1, kind: output, shape index: {}]
  $region1: #{tile.44} parent=0
    #allocation0 [shape = 'u8[8192]{0}', space=vmem, size = 0x2000, scoped, tag = 'scoped mem for output reshape']
    %s2 = smov 3
    %v3 = vld [vmem:[%s0] ss:$8 sm:%s2]
    %vm4 = vcmask 130048
    %5 = vst.msk [vmem:[#allocation0] ss:$8 sm:$0x3] %vm4, %v3
    %s6 = scalar_lea.vmem %s0, 7
    %s7 = smov 3
    %v8 = vld [vmem:[%s6] ss:$8 sm:%s7]
    %9 = vrot.lane.b32.xlu0 %v8, 112
    %v10 = vpop.permute.xlu0 %9
    %vm11 = vcmask 1048448
    %12 = vst.msk [vmem:[#allocation0] ss:$8 sm:$0x3] %vm11, %v10
    %s13 = scalar_lea.vmem %s0, 6
    %s14 = smov 3
    %v15 = vld [vmem:[%s13] ss:$8 sm:%s14]
    %16 = vrot.lane.b32.xlu0 %v15, 96
    %v17 = vpop.permute.xlu0 %16
    %vm18 = vcmask 917248
    %19 = vst.msk [vmem:[#allocation0] ss:$8 sm:$0x3] %vm18, %v17
    %s20 = scalar_lea.vmem %s0, 5
    %s21 = smov 3
    %v22 = vld [vmem:[%s20] ss:$8 sm:%s21]
    %23 = vrot.lane.b32.xlu0 %v22, 80
    %v24 = vpop.permute.xlu0 %23
    %vm25 = vcmask 786048
    %26 = vst.msk [vmem:[#allocation0] ss:$8 sm:$0x3] %vm25, %v24
    %s27 = scalar_lea.vmem %s0, 4
    %s28 = smov 3
    %v29 = vld [vmem:[%s27] ss:$8 sm:%s28]
    %30 = vrot.lane.b32.xlu0 %v29, 64
    %v31 = vpop.permute.xlu0 %30
    %vm32 = vcmask 654848
    %33 = vst.msk [vmem:[#allocation0] ss:$8 sm:$0x3] %vm32, %v31
    %s34 = scalar_lea.vmem %s0, 3
    %s35 = smov 3
    %v36 = vld [vmem:[%s34] ss:$8 sm:%s35]
    %37 = vrot.lane.b32.xlu0 %v36, 48
    %v38 = vpop.permute.xlu0 %37
    %vm39 = vcmask 523648
    %40 = vst.msk [vmem:[#allocation0] ss:$8 sm:$0x3] %vm39, %v38
    %s41 = scalar_lea.vmem %s0, 2
    %s42 = smov 3
    %v43 = vld [vmem:[%s41] ss:$8 sm:%s42]
    %44 = vrot.lane.b32.xlu0 %v43, 32
    %v45 = vpop.permute.xlu0 %44
    %vm46 = vcmask 392448
    %47 = vst.msk [vmem:[#allocation0] ss:$8 sm:$0x3] %vm46, %v45
    %s48 = scalar_lea.vmem %s0, 1
    %s49 = smov 3
    %v50 = vld [vmem:[%s48] ss:$8 sm:%s49]
    %51 = vrot.lane.b32.xlu0 %v50, 16
    %v52 = vpop.permute.xlu0 %51
    %vm53 = vcmask 261248
    %54 = vst.msk [vmem:[#allocation0] ss:$8 sm:$0x3] %vm53, %v52
    %s56 = sshllo.u32 0, 1
    %v58 = vld [vmem:[#allocation0] sm:%s56]
    %s59 = sshllo.u32 0, 1
    %60 = vst [vmem:[%s1] sm:%s59] %v58
    %s61 = scalar_lea.vmem [#allocation0], 8
    %v62 = vld [vmem:[%s61] sm:%s56]
    %s63 = sshllo.u32 0, 1
    %s64 = scalar_lea.vmem %s1, 1
    %65 = vst [vmem:[%s64] sm:%s63] %v62

// kernel: discriminator_forward.5
$region0: #{discriminator_forward.5}
  #allocation0 [shape = 'u32[]', space=smem, size = 0x4, offset = 0x4, fixed_abs, tag = 'smem constant byte address 0x4 - core index']
  #allocation1 [shape = 'u32[144,128]{1,0:T(1,128)}', space=vmem, size = 0x12000, scoped, tag = 'internal scratch']
  %s0 = inlined_call_operand.vmem [shape: bf16[32,288], index: 0, kind: input, shape index: {}]
  %s1 = inlined_call_operand.vmem [shape: bf16[288,256], index: 1, kind: input, shape index: {}]
  %s2 = inlined_call_operand.vmem [shape: f32[1,256], index: 2, kind: input, shape index: {}]
  %s3 = inlined_call_operand.vmem [shape: f32[1,256], index: 3, kind: input, shape index: {}]
  %s4 = inlined_call_operand.vmem [shape: bf16[32,256], index: 4, kind: output, shape index: {}]
  %s5 = sld [smem:[#allocation0]]
  $region26: #{discriminator_forward.5} parent=0
    _
  %s7 = ssub.s32 1, %s5
  %s8 = scalar_select 0, %s7, %s5
  // Predicated region
  $region2: #{discriminator_forward.5} parent=0 // pred_check
    _
  $region3: #{discriminator_forward.5} parent=0 // pred_check_branch
    %10 = sbr.rel (0) target = $region5
  $region4: #{discriminator_forward.5} parent=0 // pred_region
    _
  $region5: #{discriminator_forward.5} parent=0 // pred_fallthru
    _
  // Predicated region
  $region6: #{discriminator_forward.5} parent=0 // pred_check
    _
  $region7: #{discriminator_forward.5} parent=0 // pred_check_branch
    %12 = sbr.rel (0) target = $region9
  $region8: #{discriminator_forward.5} parent=0 // pred_region
    _
  $region9: #{discriminator_forward.5} parent=0 // pred_fallthru
    _
  // Predicated region
  $region10: #{discriminator_forward.5} parent=0 // pred_check
    _
  $region11: #{discriminator_forward.5} parent=0 // pred_check_branch
    %14 = sbr.rel (0) target = $region13
  $region12: #{discriminator_forward.5} parent=0 // pred_region
    _
  $region13: #{discriminator_forward.5} parent=0 // pred_fallthru
    _
  // Predicated region
  $region14: #{discriminator_forward.5} parent=0 // pred_check
    _
  $region15: #{discriminator_forward.5} parent=0 // pred_check_branch
    %16 = sbr.rel (0) target = $region17
  $region16: #{discriminator_forward.5} parent=0 // pred_region
    _
  $region17: #{discriminator_forward.5} parent=0 // pred_fallthru
    _
  %v18 = vld [vmem:[%s0] sm:$0xff]
  %v19 = vld [vmem:[%s0 + $0x8] sm:$0xf]
  %v20 = vld [vmem:[%s0 + $0xc] sm:$0xff]
  %v21 = vld [vmem:[%s0 + $0x14] sm:$0xf]
  %v22 = vld [vmem:[%s0 + $0x18] sm:$0xff]
  %v23 = vld [vmem:[%s0 + $0x20] sm:$0xf]
  %v24 = vld [vmem:[%s0 + $0x24] sm:$0xff]
  %v25 = vld [vmem:[%s0 + $0x2c] sm:$0xf]
  %v26 = vld [vmem:[%s1] sm:$0xff]
  %v27 = vld [vmem:[%s1 + $0x8] sm:$0xff]
  %v28 = vld [vmem:[%s1 + $0x10] sm:$0xff]
  %v29 = vld [vmem:[%s1 + $0x18] sm:$0xff]
  %v30 = vld [vmem:[%s1 + $0x20] sm:$0xff]
  %v31 = vld [vmem:[%s1 + $0x28] sm:$0xff]
  %v32 = vld [vmem:[%s1 + $0x30] sm:$0xff]
  %v33 = vld [vmem:[%s1 + $0x38] sm:$0xff]
  %v34 = vld [vmem:[%s1 + $0x40] sm:$0xff]
  %v35 = vld [vmem:[%s1 + $0x48] sm:$0xff]
  %v36 = vld [vmem:[%s1 + $0x50] sm:$0xff]
  %v37 = vld [vmem:[%s1 + $0x58] sm:$0xff]
  %v38 = vld [vmem:[%s1 + $0x60] sm:$0xff]
  %v39 = vld [vmem:[%s1 + $0x68] sm:$0xff]
  %v40 = vld [vmem:[%s1 + $0x70] sm:$0xff]
  %v41 = vld [vmem:[%s1 + $0x78] sm:$0xff]
  %v42 = vld [vmem:[%s1 + $0x80] sm:$0xff]
  %v43 = vld [vmem:[%s1 + $0x88] sm:$0xff]
  %v44 = vld [vmem:[%s1 + $0x90] sm:$0xff]
  %v45 = vld [vmem:[%s1 + $0x98] sm:$0xff]
  %v46 = vld [vmem:[%s1 + $0xa0] sm:$0xff]
  %v47 = vld [vmem:[%s1 + $0xa8] sm:$0xff]
  %v48 = vld [vmem:[%s1 + $0xb0] sm:$0xff]
  %v49 = vld [vmem:[%s1 + $0xb8] sm:$0xff]
  %v50 = vld [vmem:[%s1 + $0xc0] sm:$0xff]
  %v51 = vld [vmem:[%s1 + $0xc8] sm:$0xff]
  %v52 = vld [vmem:[%s1 + $0xd0] sm:$0xff]
  %v53 = vld [vmem:[%s1 + $0xd8] sm:$0xff]
  %v54 = vld [vmem:[%s1 + $0xe0] sm:$0xff]
  %v55 = vld [vmem:[%s1 + $0xe8] sm:$0xff]
  %v56 = vld [vmem:[%s1 + $0xf0] sm:$0xff]
  %v57 = vld [vmem:[%s1 + $0xf8] sm:$0xff]
  %v58 = vld [vmem:[%s1 + $0x100] sm:$0xff]
  %v59 = vld [vmem:[%s1 + $0x108] sm:$0xff]
  %v60 = vld [vmem:[%s1 + $0x110] sm:$0xff]
  %v61 = vld [vmem:[%s1 + $0x118] sm:$0xff]
  %v62 = vld [vmem:[%s2] sm:$0x3]
  %v64 = vlaneseq
  %v65 = vshrl.u32 %v64, 7
  %v66 = vsub.s32 0, %v65
  %v67 = vrot.slane %v62, %v66
  %v68 = vlaneseq
  %v69 = vshrl.u32 %v68, 7
  %v70 = vsub.s32 1, %v69
  %v71 = vrot.slane %v62, %v70
  %v82 = vunpack.c.l.b16 %v18
  %v83 = vunpack.c.h.b16 %v18
  %v84 = vunpack.c.l.b16 %v19
  %v85 = vunpack.c.l.b16 %v20
  %v86 = vunpack.c.h.b16 %v20
  %v87 = vunpack.c.l.b16 %v21
  %v88 = vunpack.c.l.b16 %v22
  %v89 = vunpack.c.h.b16 %v22
  %v90 = vunpack.c.l.b16 %v23
  %v91 = vunpack.c.l.b16 %v24
  %v92 = vunpack.c.h.b16 %v24
  %v93 = vunpack.c.l.b16 %v25
  %v94 = vpack.c.b16 %v85, %v82
  %v95 = vpack.c.b16 %v86, %v83
  %v96 = vpack.c.b16 %v87, %v84
  %v97 = vpack.c.b16 %v91, %v88
  %v98 = vpack.c.b16 %v92, %v89
  %v99 = vpack.c.b16 %v93, %v90
  %v140 = vunpack.c.l.b16 %v26
  %v141 = vunpack.c.h.b16 %v26
  %v142 = vunpack.c.l.b16 %v27
  %v143 = vunpack.c.h.b16 %v27
  %v144 = vunpack.c.l.b16 %v28
  %v145 = vunpack.c.h.b16 %v28
  %v146 = vunpack.c.l.b16 %v29
  %v147 = vunpack.c.h.b16 %v29
  %v148 = vunpack.c.l.b16 %v30
  %v149 = vunpack.c.h.b16 %v30
  %v150 = vunpack.c.l.b16 %v31
  %v151 = vunpack.c.h.b16 %v31
  %v152 = vunpack.c.l.b16 %v32
  %v153 = vunpack.c.h.b16 %v32
  %v154 = vunpack.c.l.b16 %v33
  %v155 = vunpack.c.h.b16 %v33
  %v156 = vunpack.c.l.b16 %v34
  %v157 = vunpack.c.h.b16 %v34
  %v158 = vunpack.c.l.b16 %v35
  %v159 = vunpack.c.h.b16 %v35
  %v160 = vunpack.c.l.b16 %v36
  %v161 = vunpack.c.h.b16 %v36
  %v162 = vunpack.c.l.b16 %v37
  %v163 = vunpack.c.h.b16 %v37
  %v164 = vunpack.c.l.b16 %v38
  %v165 = vunpack.c.h.b16 %v38
  %v166 = vunpack.c.l.b16 %v39
  %v167 = vunpack.c.h.b16 %v39
  %v168 = vunpack.c.l.b16 %v40
  %v169 = vunpack.c.h.b16 %v40
  %v170 = vunpack.c.l.b16 %v41
  %v171 = vunpack.c.h.b16 %v41
  %v172 = vunpack.c.l.b16 %v42
  %v173 = vunpack.c.h.b16 %v42
  %v174 = vunpack.c.l.b16 %v43
  %v175 = vunpack.c.h.b16 %v43
  %v176 = vunpack.c.l.b16 %v44
  %v177 = vunpack.c.h.b16 %v44
  %v178 = vunpack.c.l.b16 %v45
  %v179 = vunpack.c.h.b16 %v45
  %v180 = vunpack.c.l.b16 %v46
  %v181 = vunpack.c.h.b16 %v46
  %v182 = vunpack.c.l.b16 %v47
  %v183 = vunpack.c.h.b16 %v47
  %v184 = vunpack.c.l.b16 %v48
  %v185 = vunpack.c.h.b16 %v48
  %v186 = vunpack.c.l.b16 %v49
  %v187 = vunpack.c.h.b16 %v49
  %v188 = vunpack.c.l.b16 %v50
  %v189 = vunpack.c.h.b16 %v50
  %v190 = vunpack.c.l.b16 %v51
  %v191 = vunpack.c.h.b16 %v51
  %v192 = vunpack.c.l.b16 %v52
  %v193 = vunpack.c.h.b16 %v52
  %v194 = vunpack.c.l.b16 %v53
  %v195 = vunpack.c.h.b16 %v53
  %v196 = vunpack.c.l.b16 %v54
  %v197 = vunpack.c.h.b16 %v54
  %v198 = vunpack.c.l.b16 %v55
  %v199 = vunpack.c.h.b16 %v55
  %v200 = vunpack.c.l.b16 %v56
  %v201 = vunpack.c.h.b16 %v56
  %v202 = vunpack.c.l.b16 %v57
  %v203 = vunpack.c.h.b16 %v57
  %v204 = vunpack.c.l.b16 %v58
  %v205 = vunpack.c.h.b16 %v58
  %v206 = vunpack.c.l.b16 %v59
  %v207 = vunpack.c.h.b16 %v59
  %v208 = vunpack.c.l.b16 %v60
  %v209 = vunpack.c.h.b16 %v60
  %v210 = vunpack.c.l.b16 %v61
  %v211 = vunpack.c.h.b16 %v61
  %v212 = vpack.c.b16 %v142, %v140
  %v213 = vpack.c.b16 %v143, %v141
  %v214 = vpack.c.b16 %v146, %v144
  %v215 = vpack.c.b16 %v147, %v145
  %v216 = vpack.c.b16 %v150, %v148
  %v217 = vpack.c.b16 %v151, %v149
  %v218 = vpack.c.b16 %v154, %v152
  %v219 = vpack.c.b16 %v155, %v153
  %v220 = vpack.c.b16 %v158, %v156
  %v221 = vpack.c.b16 %v159, %v157
  %v222 = vpack.c.b16 %v162, %v160
  %v223 = vpack.c.b16 %v163, %v161
  %v224 = vpack.c.b16 %v166, %v164
  %v225 = vpack.c.b16 %v167, %v165
  %v226 = vpack.c.b16 %v170, %v168
  %v227 = vpack.c.b16 %v171, %v169
  %v228 = vpack.c.b16 %v174, %v172
  %v229 = vpack.c.b16 %v175, %v173
  %v230 = vpack.c.b16 %v178, %v176
  %v231 = vpack.c.b16 %v179, %v177
  %v232 = vpack.c.b16 %v182, %v180
  %v233 = vpack.c.b16 %v183, %v181
  %v234 = vpack.c.b16 %v186, %v184
  %v235 = vpack.c.b16 %v187, %v185
  %v236 = vpack.c.b16 %v190, %v188
  %v237 = vpack.c.b16 %v191, %v189
  %v238 = vpack.c.b16 %v194, %v192
  %v239 = vpack.c.b16 %v195, %v193
  %v240 = vpack.c.b16 %v198, %v196
  %v241 = vpack.c.b16 %v199, %v197
  %v242 = vpack.c.b16 %v202, %v200
  %v243 = vpack.c.b16 %v203, %v201
  %v244 = vpack.c.b16 %v206, %v204
  %v245 = vpack.c.b16 %v207, %v205
  %v246 = vpack.c.b16 %v210, %v208
  %v247 = vpack.c.b16 %v211, %v209
  %vm284 = vcmask 261120
  %v286 = vsel %vm284, %v96, 0
  %v289 = vsel %vm284, %v99, 0
  %291 = vmatprep.subr.bf16.mxu0 %v213
  %292 = vmatpush1.bf16.msra.mxu0 %v212
  %293 = vmatprep.subr.bf16.mxu0 %v215
  %294 = vmatpush1.bf16.msra.mxu0 %v214
  %295 = vmatprep.subr.bf16.mxu0 %v217
  %296 = vmatpush1.bf16.msra.mxu0 %v216
  %297 = vmatprep.subr.bf16.mxu0 %v219
  %298 = vmatpush1.bf16.msra.mxu0 %v218
  %299 = vmatprep.subr.bf16.mxu0 %v221
  %300 = vmatpush1.bf16.msra.mxu0 %v220
  %301 = vmatprep.subr.bf16.mxu0 %v223
  %302 = vmatpush1.bf16.msra.mxu0 %v222
  %303 = vmatprep.subr.bf16.mxu0 %v225
  %304 = vmatpush1.bf16.msra.mxu0 %v224
  %305 = vmatprep.subr.bf16.mxu0 %v227
  %306 = vmatpush1.bf16.msra.mxu0 %v226
  %307 = vmatprep.subr.bf16.mxu0 %v229
  %308 = vmatpush1.bf16.msra.mxu0 %v228
  %309 = vmatprep.subr.bf16.mxu0 %v231
  %310 = vmatpush1.bf16.msra.mxu0 %v230
  %311 = vmatprep.subr.bf16.mxu0 %v233
  %312 = vmatpush1.bf16.msra.mxu0 %v232
  %313 = vmatprep.subr.bf16.mxu0 %v235
  %314 = vmatpush1.bf16.msra.mxu0 %v234
  %315 = vmatprep.subr.bf16.mxu0 %v237
  %316 = vmatpush1.bf16.msra.mxu0 %v236
  %317 = vmatprep.subr.bf16.mxu0 %v239
  %318 = vmatpush1.bf16.msra.mxu0 %v238
  %319 = vmatprep.subr.bf16.mxu0 %v241
  %320 = vmatpush1.bf16.msra.mxu0 %v240
  %321 = vmatprep.subr.bf16.mxu0 %v243
  %322 = vmatpush1.bf16.msra.mxu0 %v242
  %323 = vmatprep.mubr.bf16.mxu0 %v95
  %324 = vmatmul.mubr.bf16.gmra.mrb[0].mxu0 %v94
  %v325 = vpop.f32.mrb[0].mxu0
  %v326 = vadd.f32 %v67, %v325
  %v327 = vpop.f32.mrb[0].mxu0
  %v328 = vadd.f32 %v71, %v327
  %v329 = vpop.f32.mrb[0].mxu0
  %v330 = vadd.f32 %v67, %v329
  %v331 = vpop.f32.mrb[0].mxu0
  %v332 = vadd.f32 %v71, %v331
  %333 = vmatprep.mubr.bf16.mxu0 %v98
  %334 = vmatmul.mubr.bf16.gmra.mrb[0].mxu0 %v97
  %v335 = vpop.f32.mrb[0].mxu0
  %v336 = vadd.f32 %v67, %v335
  %v337 = vpop.f32.mrb[0].mxu0
  %v338 = vadd.f32 %v71, %v337
  %v339 = vpop.f32.mrb[0].mxu0
  %v340 = vadd.f32 %v67, %v339
  %v341 = vpop.f32.mrb[0].mxu0
  %v342 = vadd.f32 %v71, %v341
  %343 = vdwg.mxu0
  %344 = vmatprep.subr.bf16.mxu0 %v245
  %345 = vmatpush1.bf16.msra.mxu0 %v244
  %346 = vmatprep.subr.bf16.mxu0 %v247
  %347 = vmatpush1.bf16.msra.mxu0 %v246
  %348 = vmatprep.subr.bf16.mxu0 0
  %349 = vmatpush1.bf16.msra.mxu0 0
  %350 = vmatprep.subr.bf16.mxu0 0
  %351 = vmatpush1.bf16.msra.mxu0 0
  %352 = vmatprep.subr.bf16.mxu0 0
  %353 = vmatpush1.bf16.msra.mxu0 0
  %354 = vmatprep.subr.bf16.mxu0 0
  %355 = vmatpush1.bf16.msra.mxu0 0
  %356 = vmatprep.subr.bf16.mxu0 0
  %357 = vmatpush1.bf16.msra.mxu0 0
  %358 = vmatprep.subr.bf16.mxu0 0
  %359 = vmatpush1.bf16.msra.mxu0 0
  %360 = vmatprep.subr.bf16.mxu0 0
  %361 = vmatpush1.bf16.msra.mxu0 0
  %362 = vmatprep.subr.bf16.mxu0 0
  %363 = vmatpush1.bf16.msra.mxu0 0
  %364 = vmatprep.subr.bf16.mxu0 0
  %365 = vmatpush1.bf16.msra.mxu0 0
  %366 = vmatprep.subr.bf16.mxu0 0
  %367 = vmatpush1.bf16.msra.mxu0 0
  %368 = vmatprep.subr.bf16.mxu0 0
  %369 = vmatpush1.bf16.msra.mxu0 0
  %370 = vmatprep.subr.bf16.mxu0 0
  %371 = vmatpush1.bf16.msra.mxu0 0
  %372 = vmatprep.subr.bf16.mxu0 0
  %373 = vmatpush1.bf16.msra.mxu0 0
  %374 = vmatprep.subr.bf16.mxu0 0
  %375 = vmatpush1.bf16.msra.mxu0 0
  %376 = vmatprep.mubr.bf16.mxu0 0
  %377 = vmatmul.mubr.bf16.gmra.mrb[0].mxu0 %v286
  %v378 = vpop.f32.mrb[0].mxu0
  %v379 = vadd.f32 %v326, %v378
  %v380 = vpop.f32.mrb[0].mxu0
  %v381 = vadd.f32 %v328, %v380
  %v382 = vpop.f32.mrb[0].mxu0
  %v383 = vadd.f32 %v330, %v382
  %v384 = vpop.f32.mrb[0].mxu0
  %v385 = vadd.f32 %v332, %v384
  %386 = vmatprep.mubr.bf16.mxu0 0
  %387 = vmatmul.mubr.bf16.gmra.mrb[0].mxu0 %v289
  %v388 = vpop.f32.mrb[0].mxu0
  %v389 = vadd.f32 %v336, %v388
  %v390 = vpop.f32.mrb[0].mxu0
  %v391 = vadd.f32 %v338, %v390
  %v392 = vpop.f32.mrb[0].mxu0
  %v393 = vadd.f32 %v340, %v392
  %v394 = vpop.f32.mrb[0].mxu0
  %v395 = vadd.f32 %v342, %v394
  %396 = vdwg.mxu0
  %vm397 = vcmp.gt.f32.partialorder %v379, 0.0
  %vm398 = vcmp.gt.f32.partialorder %v381, 0.0
  %vm399 = vcmp.gt.f32.partialorder %v383, 0.0
  %vm400 = vcmp.gt.f32.partialorder %v385, 0.0
  %vm401 = vcmp.gt.f32.partialorder %v389, 0.0
  %vm402 = vcmp.gt.f32.partialorder %v391, 0.0
  %vm403 = vcmp.gt.f32.partialorder %v393, 0.0
  %vm404 = vcmp.gt.f32.partialorder %v395, 0.0
  %v405 = vmul.f32 %v379, 0.2
  %v406 = vmul.f32 %v381, 0.2
  %v407 = vmul.f32 %v383, 0.2
  %v408 = vmul.f32 %v385, 0.2
  %v409 = vmul.f32 %v389, 0.2
  %v410 = vmul.f32 %v391, 0.2
  %v411 = vmul.f32 %v393, 0.2
  %v412 = vmul.f32 %v395, 0.2
  %v413 = vsel %vm397, %v379, %v405
  %v414 = vsel %vm398, %v381, %v406
  %v415 = vsel %vm399, %v383, %v407
  %v416 = vsel %vm400, %v385, %v408
  %v417 = vsel %vm401, %v389, %v409
  %v418 = vsel %vm402, %v391, %v410
  %v419 = vsel %vm403, %v393, %v411
  %v420 = vsel %vm404, %v395, %v412
  %v421 = vld [vmem:[%s3] sm:$0x3]
  %v423 = vlaneseq
  %v424 = vshrl.u32 %v423, 7
  %v425 = vsub.s32 0, %v424
  %v426 = vrot.slane %v421, %v425
  %v427 = vlaneseq
  %v428 = vshrl.u32 %v427, 7
  %v429 = vsub.s32 1, %v428
  %v430 = vrot.slane %v421, %v429
  %v433 = vadd.f32 %v413, %v426
  %v434 = vadd.f32 %v414, %v430
  %v435 = vadd.f32 %v415, %v426
  %v436 = vadd.f32 %v416, %v430
  %v437 = vadd.f32 %v417, %v426
  %v438 = vadd.f32 %v418, %v430
  %v439 = vadd.f32 %v419, %v426
  %v440 = vadd.f32 %v420, %v430
  %v441 = vpack.c.bf16 %v435, %v433
  %v442 = vpack.c.bf16 %v436, %v434
  %v443 = vpack.c.bf16 %v439, %v437
  %v444 = vpack.c.bf16 %v440, %v438
  %v449 = vunpack.c.l.b16 %v441
  %v450 = vunpack.c.l.b16 %v442
  %v451 = vunpack.c.h.b16 %v441
  %v452 = vunpack.c.h.b16 %v442
  %v453 = vunpack.c.l.b16 %v443
  %v454 = vunpack.c.l.b16 %v444
  %v455 = vunpack.c.h.b16 %v443
  %v456 = vunpack.c.h.b16 %v444
  %v457 = vpack.c.b16 %v450, %v449
  %v458 = vpack.c.b16 %v452, %v451
  %v459 = vpack.c.b16 %v454, %v453
  %v460 = vpack.c.b16 %v456, %v455
  %465 = vst [vmem:[%s4] sm:$0xff] %v457
  %466 = vst [vmem:[%s4 + $0x8] sm:$0xff] %v458
  %467 = vst [vmem:[%s4 + $0x10] sm:$0xff] %v459
  %468 = vst [vmem:[%s4 + $0x18] sm:$0xff] %v460
  // Predicated region
  $region18: #{discriminator_forward.5} parent=0 // pred_check
    _
  $region19: #{discriminator_forward.5} parent=0 // pred_check_branch
    %470 = sbr.rel (0) target = $region21
  $region20: #{discriminator_forward.5} parent=0 // pred_region
    _
  $region21: #{discriminator_forward.5} parent=0 // pred_fallthru
    _
  // Predicated region
  $region22: #{discriminator_forward.5} parent=0 // pred_check
    _
  $region23: #{discriminator_forward.5} parent=0 // pred_check_branch
    %472 = sbr.rel (0) target = $region25
  $region24: #{discriminator_forward.5} parent=0 // pred_region
    _
  $region25: #{discriminator_forward.5} parent=0 // pred_fallthru
    _

// kernel: mul.35
$region0: #{mul.35}
  #allocation0 [shape = 's32[1]{0}', space=sflag, size = 0x4, scoped, tag = 'scoped memory for mul.35']
  %s0 = inlined_call_operand.vmem [shape: f32[32], index: 0, kind: input, shape index: {}]
  %s1 = inlined_call_operand.vmem [shape: f32[32], index: 1, kind: input, shape index: {}]
  %s2 = inlined_call_operand.vmem [shape: f32[32], index: 2, kind: output, shape index: {}]
  %v3 = vld [vmem:[%s0] sm:$0x1]
  %v4 = vld [vmem:[%s1] sm:$0x1]
  %5 = xla_tuple %v3, %v4
  %6 = xla_tuple %5
  %v7 = vmul.f32 %v3, %v4
  %8 = xla_tuple %v7
  %9 = vst [vmem:[%s2] sm:$0x1] %v7

// kernel: tile.53
$region0: #{tile.53}
  #allocation0 [shape = 's32[1]{0}', space=sflag, size = 0x4, scoped, tag = 'scoped memory for tile.53']
  %s0 = inlined_call_operand.vmem [shape: f32[32], index: 0, kind: input, shape index: {}]
  %s1 = inlined_call_operand.vmem [shape: f32[8,32], index: 1, kind: output, shape index: {}]
  // Predicated region
  $region2: #{tile.53} parent=0 // pred_check
    _
  $region3: #{tile.53} parent=0 // pred_check_branch
    %3 = sbr.rel (0) target = $region5
  $region4: #{tile.53} parent=0 // pred_region
    _
  $region5: #{tile.53} parent=0 // pred_fallthru
    _
  %v4 = vld [vmem:[%s0] ss:$0 sm:$0xff]
  %5 = vst [vmem:[%s1] sm:$0xff] %v4

// kernel: tile.54
$region0: #{tile.54}
  %s0 = inlined_call_operand.vmem [shape: f32[8,32], index: 0, kind: input, shape index: {}]
  %s1 = inlined_call_operand.vmem [shape: f32[1,256], index: 1, kind: output, shape index: {}]
  $region1: #{tile.54} parent=0
    #allocation0 [shape = 'u8[8192]{0}', space=vmem, size = 0x2000, scoped, tag = 'scoped mem for output reshape']
    %s2 = smov 3
    %v3 = vld [vmem:[%s0] ss:$4 sm:%s2]
    %vm4 = vcmask 261120
    %5 = vst.msk [vmem:[#allocation0] ss:$8 sm:$0x3] %vm4, %v3
    %s6 = scalar_lea.vmem %s0, 3
    %s7 = smov 3
    %v8 = vld [vmem:[%s6] ss:$4 sm:%s7]
    %9 = vrot.lane.b32.xlu0 %v8, 96
    %v10 = vpop.permute.xlu0 %9
    %vm11 = vcmask 1048320
    %12 = vst.msk [vmem:[#allocation0] ss:$8 sm:$0x3] %vm11, %v10
    %s13 = scalar_lea.vmem %s0, 2
    %s14 = smov 3
    %v15 = vld [vmem:[%s13] ss:$4 sm:%s14]
    %16 = vrot.lane.b32.xlu0 %v15, 64
    %v17 = vpop.permute.xlu0 %16
    %vm18 = vcmask 785920
    %19 = vst.msk [vmem:[#allocation0] ss:$8 sm:$0x3] %vm18, %v17
    %s20 = scalar_lea.vmem %s0, 1
    %s21 = smov 3
    %v22 = vld [vmem:[%s20] ss:$4 sm:%s21]
    %23 = vrot.lane.b32.xlu0 %v22, 32
    %v24 = vpop.permute.xlu0 %23
    %vm25 = vcmask 523520
    %26 = vst.msk [vmem:[#allocation0] ss:$8 sm:$0x3] %vm25, %v24
    %s28 = sshllo.u32 0, 1
    %v30 = vld [vmem:[#allocation0] sm:%s28]
    %s31 = sshllo.u32 0, 1
    %32 = vst [vmem:[%s1] sm:%s31] %v30
    %s33 = scalar_lea.vmem [#allocation0], 8
    %v34 = vld [vmem:[%s33] sm:%s28]
    %s35 = sshllo.u32 0, 1
    %s36 = scalar_lea.vmem %s1, 1
    %37 = vst [vmem:[%s36] sm:%s35] %v34

// kernel: discriminator_forward.6
$region0: #{discriminator_forward.6}
  #allocation0 [shape = 'u32[]', space=smem, size = 0x4, offset = 0x4, fixed_abs, tag = 'smem constant byte address 0x4 - core index']
  #allocation1 [shape = 'u32[144,128]{1,0:T(1,128)}', space=vmem, size = 0x12000, scoped, tag = 'internal scratch']
  %s0 = inlined_call_operand.vmem [shape: bf16[16,768], index: 0, kind: input, shape index: {}]
  %s1 = inlined_call_operand.vmem [shape: bf16[768,256], index: 1, kind: input, shape index: {}]
  %s2 = inlined_call_operand.vmem [shape: f32[1,256], index: 2, kind: input, shape index: {}]
  %s3 = inlined_call_operand.vmem [shape: f32[1,256], index: 3, kind: input, shape index: {}]
  %s4 = inlined_call_operand.vmem [shape: bf16[16,256], index: 4, kind: output, shape index: {}]
  %s5 = sld [smem:[#allocation0]]
  $region26: #{discriminator_forward.6} parent=0
    _
  %s7 = ssub.s32 1, %s5
  %s8 = scalar_select 0, %s7, %s5
  // Predicated region
  $region2: #{discriminator_forward.6} parent=0 // pred_check
    _
  $region3: #{discriminator_forward.6} parent=0 // pred_check_branch
    %10 = sbr.rel (0) target = $region5
  $region4: #{discriminator_forward.6} parent=0 // pred_region
    _
  $region5: #{discriminator_forward.6} parent=0 // pred_fallthru
    _
  // Predicated region
  $region6: #{discriminator_forward.6} parent=0 // pred_check
    _
  $region7: #{discriminator_forward.6} parent=0 // pred_check_branch
    %12 = sbr.rel (0) target = $region9
  $region8: #{discriminator_forward.6} parent=0 // pred_region
    _
  $region9: #{discriminator_forward.6} parent=0 // pred_fallthru
    _
  // Predicated region
  $region10: #{discriminator_forward.6} parent=0 // pred_check
    _
  $region11: #{discriminator_forward.6} parent=0 // pred_check_branch
    %14 = sbr.rel (0) target = $region13
  $region12: #{discriminator_forward.6} parent=0 // pred_region
    _
  $region13: #{discriminator_forward.6} parent=0 // pred_fallthru
    _
  // Predicated region
  $region14: #{discriminator_forward.6} parent=0 // pred_check
    _
  $region15: #{discriminator_forward.6} parent=0 // pred_check_branch
    %16 = sbr.rel (0) target = $region17
  $region16: #{discriminator_forward.6} parent=0 // pred_region
    _
  $region17: #{discriminator_forward.6} parent=0 // pred_fallthru
    _
  %v17 = vld [vmem:[%s0] sm:$0xff]
  %v18 = vld [vmem:[%s0 + $0x8] sm:$0xff]
  %v19 = vld [vmem:[%s0 + $0x10] sm:$0xff]
  %v20 = vld [vmem:[%s0 + $0x18] sm:$0xff]
  %v21 = vld [vmem:[%s0 + $0x20] sm:$0xff]
  %v22 = vld [vmem:[%s0 + $0x28] sm:$0xff]
  %v23 = vld [vmem:[%s1] sm:$0xff]
  %v24 = vld [vmem:[%s1 + $0x8] sm:$0xff]
  %v25 = vld [vmem:[%s1 + $0x10] sm:$0xff]
  %v26 = vld [vmem:[%s1 + $0x18] sm:$0xff]
  %v27 = vld [vmem:[%s1 + $0x20] sm:$0xff]
  %v28 = vld [vmem:[%s1 + $0x28] sm:$0xff]
  %v29 = vld [vmem:[%s1 + $0x30] sm:$0xff]
  %v30 = vld [vmem:[%s1 + $0x38] sm:$0xff]
  %v31 = vld [vmem:[%s1 + $0x40] sm:$0xff]
  %v32 = vld [vmem:[%s1 + $0x48] sm:$0xff]
  %v33 = vld [vmem:[%s1 + $0x50] sm:$0xff]
  %v34 = vld [vmem:[%s1 + $0x58] sm:$0xff]
  %v35 = vld [vmem:[%s1 + $0x60] sm:$0xff]
  %v36 = vld [vmem:[%s1 + $0x68] sm:$0xff]
  %v37 = vld [vmem:[%s1 + $0x70] sm:$0xff]
  %v38 = vld [vmem:[%s1 + $0x78] sm:$0xff]
  %v39 = vld [vmem:[%s1 + $0x80] sm:$0xff]
  %v40 = vld [vmem:[%s1 + $0x88] sm:$0xff]
  %v41 = vld [vmem:[%s1 + $0x90] sm:$0xff]
  %v42 = vld [vmem:[%s1 + $0x98] sm:$0xff]
  %v43 = vld [vmem:[%s1 + $0xa0] sm:$0xff]
  %v44 = vld [vmem:[%s1 + $0xa8] sm:$0xff]
  %v45 = vld [vmem:[%s1 + $0xb0] sm:$0xff]
  %v46 = vld [vmem:[%s1 + $0xb8] sm:$0xff]
  %v47 = vld [vmem:[%s1 + $0xc0] sm:$0xff]
  %v48 = vld [vmem:[%s1 + $0xc8] sm:$0xff]
  %v49 = vld [vmem:[%s1 + $0xd0] sm:$0xff]
  %v50 = vld [vmem:[%s1 + $0xd8] sm:$0xff]
  %v51 = vld [vmem:[%s1 + $0xe0] sm:$0xff]
  %v52 = vld [vmem:[%s1 + $0xe8] sm:$0xff]
  %v53 = vld [vmem:[%s1 + $0xf0] sm:$0xff]
  %v54 = vld [vmem:[%s1 + $0xf8] sm:$0xff]
  %v55 = vld [vmem:[%s1 + $0x100] sm:$0xff]
  %v56 = vld [vmem:[%s1 + $0x108] sm:$0xff]
  %v57 = vld [vmem:[%s1 + $0x110] sm:$0xff]
  %v58 = vld [vmem:[%s1 + $0x118] sm:$0xff]
  %v59 = vld [vmem:[%s1 + $0x120] sm:$0xff]
  %v60 = vld [vmem:[%s1 + $0x128] sm:$0xff]
  %v61 = vld [vmem:[%s1 + $0x130] sm:$0xff]
  %v62 = vld [vmem:[%s1 + $0x138] sm:$0xff]
  %v63 = vld [vmem:[%s1 + $0x140] sm:$0xff]
  %v64 = vld [vmem:[%s1 + $0x148] sm:$0xff]
  %v65 = vld [vmem:[%s1 + $0x150] sm:$0xff]
  %v66 = vld [vmem:[%s1 + $0x158] sm:$0xff]
  %v67 = vld [vmem:[%s1 + $0x160] sm:$0xff]
  %v68 = vld [vmem:[%s1 + $0x168] sm:$0xff]
  %v69 = vld [vmem:[%s1 + $0x170] sm:$0xff]
  %v70 = vld [vmem:[%s1 + $0x178] sm:$0xff]
  %v71 = vld [vmem:[%s1 + $0x180] sm:$0xff]
  %v72 = vld [vmem:[%s1 + $0x188] sm:$0xff]
  %v73 = vld [vmem:[%s1 + $0x190] sm:$0xff]
  %v74 = vld [vmem:[%s1 + $0x198] sm:$0xff]
  %v75 = vld [vmem:[%s1 + $0x1a0] sm:$0xff]
  %v76 = vld [vmem:[%s1 + $0x1a8] sm:$0xff]
  %v77 = vld [vmem:[%s1 + $0x1b0] sm:$0xff]
  %v78 = vld [vmem:[%s1 + $0x1b8] sm:$0xff]
  %v79 = vld [vmem:[%s1 + $0x1c0] sm:$0xff]
  %v80 = vld [vmem:[%s1 + $0x1c8] sm:$0xff]
  %v81 = vld [vmem:[%s1 + $0x1d0] sm:$0xff]
  %v82 = vld [vmem:[%s1 + $0x1d8] sm:$0xff]
  %v83 = vld [vmem:[%s1 + $0x1e0] sm:$0xff]
  %v84 = vld [vmem:[%s1 + $0x1e8] sm:$0xff]
  %v85 = vld [vmem:[%s1 + $0x1f0] sm:$0xff]
  %v86 = vld [vmem:[%s1 + $0x1f8] sm:$0xff]
  %v87 = vld [vmem:[%s1 + $0x200] sm:$0xff]
  %v88 = vld [vmem:[%s1 + $0x208] sm:$0xff]
  %v89 = vld [vmem:[%s1 + $0x210] sm:$0xff]
  %v90 = vld [vmem:[%s1 + $0x218] sm:$0xff]
  %v91 = vld [vmem:[%s1 + $0x220] sm:$0xff]
  %v92 = vld [vmem:[%s1 + $0x228] sm:$0xff]
  %v93 = vld [vmem:[%s1 + $0x230] sm:$0xff]
  %v94 = vld [vmem:[%s1 + $0x238] sm:$0xff]
  %v95 = vld [vmem:[%s1 + $0x240] sm:$0xff]
  %v96 = vld [vmem:[%s1 + $0x248] sm:$0xff]
  %v97 = vld [vmem:[%s1 + $0x250] sm:$0xff]
  %v98 = vld [vmem:[%s1 + $0x258] sm:$0xff]
  %v99 = vld [vmem:[%s1 + $0x260] sm:$0xff]
  %v100 = vld [vmem:[%s1 + $0x268] sm:$0xff]
  %v101 = vld [vmem:[%s1 + $0x270] sm:$0xff]
  %v102 = vld [vmem:[%s1 + $0x278] sm:$0xff]
  %v103 = vld [vmem:[%s1 + $0x280] sm:$0xff]
  %v104 = vld [vmem:[%s1 + $0x288] sm:$0xff]
  %v105 = vld [vmem:[%s1 + $0x290] sm:$0xff]
  %v106 = vld [vmem:[%s1 + $0x298] sm:$0xff]
  %v107 = vld [vmem:[%s1 + $0x2a0] sm:$0xff]
  %v108 = vld [vmem:[%s1 + $0x2a8] sm:$0xff]
  %v109 = vld [vmem:[%s1 + $0x2b0] sm:$0xff]
  %v110 = vld [vmem:[%s1 + $0x2b8] sm:$0xff]
  %v111 = vld [vmem:[%s1 + $0x2c0] sm:$0xff]
  %v112 = vld [vmem:[%s1 + $0x2c8] sm:$0xff]
  %v113 = vld [vmem:[%s1 + $0x2d0] sm:$0xff]
  %v114 = vld [vmem:[%s1 + $0x2d8] sm:$0xff]
  %v115 = vld [vmem:[%s1 + $0x2e0] sm:$0xff]
  %v116 = vld [vmem:[%s1 + $0x2e8] sm:$0xff]
  %v117 = vld [vmem:[%s1 + $0x2f0] sm:$0xff]
  %v118 = vld [vmem:[%s1 + $0x2f8] sm:$0xff]
  %v119 = vld [vmem:[%s2] sm:$0x3]
  %v121 = vlaneseq
  %v122 = vshrl.u32 %v121, 7
  %v123 = vsub.s32 0, %v122
  %v124 = vrot.slane %v119, %v123
  %v125 = vlaneseq
  %v126 = vshrl.u32 %v125, 7
  %v127 = vsub.s32 1, %v126
  %v128 = vrot.slane %v119, %v127
  %v137 = vunpack.c.l.b16 %v17
  %v138 = vunpack.c.h.b16 %v17
  %v139 = vunpack.c.l.b16 %v18
  %v140 = vunpack.c.h.b16 %v18
  %v141 = vunpack.c.l.b16 %v19
  %v142 = vunpack.c.h.b16 %v19
  %v143 = vunpack.c.l.b16 %v20
  %v144 = vunpack.c.h.b16 %v20
  %v145 = vunpack.c.l.b16 %v21
  %v146 = vunpack.c.h.b16 %v21
  %v147 = vunpack.c.l.b16 %v22
  %v148 = vunpack.c.h.b16 %v22
  %v149 = vpack.c.b16 %v143, %v137
  %v150 = vpack.c.b16 %v144, %v138
  %v151 = vpack.c.b16 %v145, %v139
  %v152 = vpack.c.b16 %v146, %v140
  %v153 = vpack.c.b16 %v147, %v141
  %v154 = vpack.c.b16 %v148, %v142
  %v257 = vunpack.c.l.b16 %v23
  %v258 = vunpack.c.h.b16 %v23
  %v259 = vunpack.c.l.b16 %v24
  %v260 = vunpack.c.h.b16 %v24
  %v261 = vunpack.c.l.b16 %v25
  %v262 = vunpack.c.h.b16 %v25
  %v263 = vunpack.c.l.b16 %v26
  %v264 = vunpack.c.h.b16 %v26
  %v265 = vunpack.c.l.b16 %v27
  %v266 = vunpack.c.h.b16 %v27
  %v267 = vunpack.c.l.b16 %v28
  %v268 = vunpack.c.h.b16 %v28
  %v269 = vunpack.c.l.b16 %v29
  %v270 = vunpack.c.h.b16 %v29
  %v271 = vunpack.c.l.b16 %v30
  %v272 = vunpack.c.h.b16 %v30
  %v273 = vunpack.c.l.b16 %v31
  %v274 = vunpack.c.h.b16 %v31
  %v275 = vunpack.c.l.b16 %v32
  %v276 = vunpack.c.h.b16 %v32
  %v277 = vunpack.c.l.b16 %v33
  %v278 = vunpack.c.h.b16 %v33
  %v279 = vunpack.c.l.b16 %v34
  %v280 = vunpack.c.h.b16 %v34
  %v281 = vunpack.c.l.b16 %v35
  %v282 = vunpack.c.h.b16 %v35
  %v283 = vunpack.c.l.b16 %v36
  %v284 = vunpack.c.h.b16 %v36
  %v285 = vunpack.c.l.b16 %v37
  %v286 = vunpack.c.h.b16 %v37
  %v287 = vunpack.c.l.b16 %v38
  %v288 = vunpack.c.h.b16 %v38
  %v289 = vunpack.c.l.b16 %v39
  %v290 = vunpack.c.h.b16 %v39
  %v291 = vunpack.c.l.b16 %v40
  %v292 = vunpack.c.h.b16 %v40
  %v293 = vunpack.c.l.b16 %v41
  %v294 = vunpack.c.h.b16 %v41
  %v295 = vunpack.c.l.b16 %v42
  %v296 = vunpack.c.h.b16 %v42
  %v297 = vunpack.c.l.b16 %v43
  %v298 = vunpack.c.h.b16 %v43
  %v299 = vunpack.c.l.b16 %v44
  %v300 = vunpack.c.h.b16 %v44
  %v301 = vunpack.c.l.b16 %v45
  %v302 = vunpack.c.h.b16 %v45
  %v303 = vunpack.c.l.b16 %v46
  %v304 = vunpack.c.h.b16 %v46
  %v305 = vunpack.c.l.b16 %v47
  %v306 = vunpack.c.h.b16 %v47
  %v307 = vunpack.c.l.b16 %v48
  %v308 = vunpack.c.h.b16 %v48
  %v309 = vunpack.c.l.b16 %v49
  %v310 = vunpack.c.h.b16 %v49
  %v311 = vunpack.c.l.b16 %v50
  %v312 = vunpack.c.h.b16 %v50
  %v313 = vunpack.c.l.b16 %v51
  %v314 = vunpack.c.h.b16 %v51
  %v315 = vunpack.c.l.b16 %v52
  %v316 = vunpack.c.h.b16 %v52
  %v317 = vunpack.c.l.b16 %v53
  %v318 = vunpack.c.h.b16 %v53
  %v319 = vunpack.c.l.b16 %v54
  %v320 = vunpack.c.h.b16 %v54
  %v321 = vunpack.c.l.b16 %v55
  %v322 = vunpack.c.h.b16 %v55
  %v323 = vunpack.c.l.b16 %v56
  %v324 = vunpack.c.h.b16 %v56
  %v325 = vunpack.c.l.b16 %v57
  %v326 = vunpack.c.h.b16 %v57
  %v327 = vunpack.c.l.b16 %v58
  %v328 = vunpack.c.h.b16 %v58
  %v329 = vunpack.c.l.b16 %v59
  %v330 = vunpack.c.h.b16 %v59
  %v331 = vunpack.c.l.b16 %v60
  %v332 = vunpack.c.h.b16 %v60
  %v333 = vunpack.c.l.b16 %v61
  %v334 = vunpack.c.h.b16 %v61
  %v335 = vunpack.c.l.b16 %v62
  %v336 = vunpack.c.h.b16 %v62
  %v337 = vunpack.c.l.b16 %v63
  %v338 = vunpack.c.h.b16 %v63
  %v339 = vunpack.c.l.b16 %v64
  %v340 = vunpack.c.h.b16 %v64
  %v341 = vunpack.c.l.b16 %v65
  %v342 = vunpack.c.h.b16 %v65
  %v343 = vunpack.c.l.b16 %v66
  %v344 = vunpack.c.h.b16 %v66
  %v345 = vunpack.c.l.b16 %v67
  %v346 = vunpack.c.h.b16 %v67
  %v347 = vunpack.c.l.b16 %v68
  %v348 = vunpack.c.h.b16 %v68
  %v349 = vunpack.c.l.b16 %v69
  %v350 = vunpack.c.h.b16 %v69
  %v351 = vunpack.c.l.b16 %v70
  %v352 = vunpack.c.h.b16 %v70
  %v353 = vunpack.c.l.b16 %v71
  %v354 = vunpack.c.h.b16 %v71
  %v355 = vunpack.c.l.b16 %v72
  %v356 = vunpack.c.h.b16 %v72
  %v357 = vunpack.c.l.b16 %v73
  %v358 = vunpack.c.h.b16 %v73
  %v359 = vunpack.c.l.b16 %v74
  %v360 = vunpack.c.h.b16 %v74
  %v361 = vunpack.c.l.b16 %v75
  %v362 = vunpack.c.h.b16 %v75
  %v363 = vunpack.c.l.b16 %v76
  %v364 = vunpack.c.h.b16 %v76
  %v365 = vunpack.c.l.b16 %v77
  %v366 = vunpack.c.h.b16 %v77
  %v367 = vunpack.c.l.b16 %v78
  %v368 = vunpack.c.h.b16 %v78
  %v369 = vunpack.c.l.b16 %v79
  %v370 = vunpack.c.h.b16 %v79
  %v371 = vunpack.c.l.b16 %v80
  %v372 = vunpack.c.h.b16 %v80
  %v373 = vunpack.c.l.b16 %v81
  %v374 = vunpack.c.h.b16 %v81
  %v375 = vunpack.c.l.b16 %v82
  %v376 = vunpack.c.h.b16 %v82
  %v377 = vunpack.c.l.b16 %v83
  %v378 = vunpack.c.h.b16 %v83
  %v379 = vunpack.c.l.b16 %v84
  %v380 = vunpack.c.h.b16 %v84
  %v381 = vunpack.c.l.b16 %v85
  %v382 = vunpack.c.h.b16 %v85
  %v383 = vunpack.c.l.b16 %v86
  %v384 = vunpack.c.h.b16 %v86
  %v385 = vunpack.c.l.b16 %v87
  %v386 = vunpack.c.h.b16 %v87
  %v387 = vunpack.c.l.b16 %v88
  %v388 = vunpack.c.h.b16 %v88
  %v389 = vunpack.c.l.b16 %v89
  %v390 = vunpack.c.h.b16 %v89
  %v391 = vunpack.c.l.b16 %v90
  %v392 = vunpack.c.h.b16 %v90
  %v393 = vunpack.c.l.b16 %v91
  %v394 = vunpack.c.h.b16 %v91
  %v395 = vunpack.c.l.b16 %v92
  %v396 = vunpack.c.h.b16 %v92
  %v397 = vunpack.c.l.b16 %v93
  %v398 = vunpack.c.h.b16 %v93
  %v399 = vunpack.c.l.b16 %v94
  %v400 = vunpack.c.h.b16 %v94
  %v401 = vunpack.c.l.b16 %v95
  %v402 = vunpack.c.h.b16 %v95
  %v403 = vunpack.c.l.b16 %v96
  %v404 = vunpack.c.h.b16 %v96
  %v405 = vunpack.c.l.b16 %v97
  %v406 = vunpack.c.h.b16 %v97
  %v407 = vunpack.c.l.b16 %v98
  %v408 = vunpack.c.h.b16 %v98
  %v409 = vunpack.c.l.b16 %v99
  %v410 = vunpack.c.h.b16 %v99
  %v411 = vunpack.c.l.b16 %v100
  %v412 = vunpack.c.h.b16 %v100
  %v413 = vunpack.c.l.b16 %v101
  %v414 = vunpack.c.h.b16 %v101
  %v415 = vunpack.c.l.b16 %v102
  %v416 = vunpack.c.h.b16 %v102
  %v417 = vunpack.c.l.b16 %v103
  %v418 = vunpack.c.h.b16 %v103
  %v419 = vunpack.c.l.b16 %v104
  %v420 = vunpack.c.h.b16 %v104
  %v421 = vunpack.c.l.b16 %v105
  %v422 = vunpack.c.h.b16 %v105
  %v423 = vunpack.c.l.b16 %v106
  %v424 = vunpack.c.h.b16 %v106
  %v425 = vunpack.c.l.b16 %v107
  %v426 = vunpack.c.h.b16 %v107
  %v427 = vunpack.c.l.b16 %v108
  %v428 = vunpack.c.h.b16 %v108
  %v429 = vunpack.c.l.b16 %v109
  %v430 = vunpack.c.h.b16 %v109
  %v431 = vunpack.c.l.b16 %v110
  %v432 = vunpack.c.h.b16 %v110
  %v433 = vunpack.c.l.b16 %v111
  %v434 = vunpack.c.h.b16 %v111
  %v435 = vunpack.c.l.b16 %v112
  %v436 = vunpack.c.h.b16 %v112
  %v437 = vunpack.c.l.b16 %v113
  %v438 = vunpack.c.h.b16 %v113
  %v439 = vunpack.c.l.b16 %v114
  %v440 = vunpack.c.h.b16 %v114
  %v441 = vunpack.c.l.b16 %v115
  %v442 = vunpack.c.h.b16 %v115
  %v443 = vunpack.c.l.b16 %v116
  %v444 = vunpack.c.h.b16 %v116
  %v445 = vunpack.c.l.b16 %v117
  %v446 = vunpack.c.h.b16 %v117
  %v447 = vunpack.c.l.b16 %v118
  %v448 = vunpack.c.h.b16 %v118
  %v449 = vpack.c.b16 %v259, %v257
  %v450 = vpack.c.b16 %v260, %v258
  %v451 = vpack.c.b16 %v263, %v261
  %v452 = vpack.c.b16 %v264, %v262
  %v453 = vpack.c.b16 %v267, %v265
  %v454 = vpack.c.b16 %v268, %v266
  %v455 = vpack.c.b16 %v271, %v269
  %v456 = vpack.c.b16 %v272, %v270
  %v457 = vpack.c.b16 %v275, %v273
  %v458 = vpack.c.b16 %v276, %v274
  %v459 = vpack.c.b16 %v279, %v277
  %v460 = vpack.c.b16 %v280, %v278
  %v461 = vpack.c.b16 %v283, %v281
  %v462 = vpack.c.b16 %v284, %v282
  %v463 = vpack.c.b16 %v287, %v285
  %v464 = vpack.c.b16 %v288, %v286
  %v465 = vpack.c.b16 %v291, %v289
  %v466 = vpack.c.b16 %v292, %v290
  %v467 = vpack.c.b16 %v295, %v293
  %v468 = vpack.c.b16 %v296, %v294
  %v469 = vpack.c.b16 %v299, %v297
  %v470 = vpack.c.b16 %v300, %v298
  %v471 = vpack.c.b16 %v303, %v301
  %v472 = vpack.c.b16 %v304, %v302
  %v473 = vpack.c.b16 %v307, %v305
  %v474 = vpack.c.b16 %v308, %v306
  %v475 = vpack.c.b16 %v311, %v309
  %v476 = vpack.c.b16 %v312, %v310
  %v477 = vpack.c.b16 %v315, %v313
  %v478 = vpack.c.b16 %v316, %v314
  %v479 = vpack.c.b16 %v319, %v317
  %v480 = vpack.c.b16 %v320, %v318
  %v481 = vpack.c.b16 %v323, %v321
  %v482 = vpack.c.b16 %v324, %v322
  %v483 = vpack.c.b16 %v327, %v325
  %v484 = vpack.c.b16 %v328, %v326
  %v485 = vpack.c.b16 %v331, %v329
  %v486 = vpack.c.b16 %v332, %v330
  %v487 = vpack.c.b16 %v335, %v333
  %v488 = vpack.c.b16 %v336, %v334
  %v489 = vpack.c.b16 %v339, %v337
  %v490 = vpack.c.b16 %v340, %v338
  %v491 = vpack.c.b16 %v343, %v341
  %v492 = vpack.c.b16 %v344, %v342
  %v493 = vpack.c.b16 %v347, %v345
  %v494 = vpack.c.b16 %v348, %v346
  %v495 = vpack.c.b16 %v351, %v349
  %v496 = vpack.c.b16 %v352, %v350
  %v497 = vpack.c.b16 %v355, %v353
  %v498 = vpack.c.b16 %v356, %v354
  %v499 = vpack.c.b16 %v359, %v357
  %v500 = vpack.c.b16 %v360, %v358
  %v501 = vpack.c.b16 %v363, %v361
  %v502 = vpack.c.b16 %v364, %v362
  %v503 = vpack.c.b16 %v367, %v365
  %v504 = vpack.c.b16 %v368, %v366
  %v505 = vpack.c.b16 %v371, %v369
  %v506 = vpack.c.b16 %v372, %v370
  %v507 = vpack.c.b16 %v375, %v373
  %v508 = vpack.c.b16 %v376, %v374
  %v509 = vpack.c.b16 %v379, %v377
  %v510 = vpack.c.b16 %v380, %v378
  %v511 = vpack.c.b16 %v383, %v381
  %v512 = vpack.c.b16 %v384, %v382
  %v513 = vpack.c.b16 %v387, %v385
  %v514 = vpack.c.b16 %v388, %v386
  %v515 = vpack.c.b16 %v391, %v389
  %v516 = vpack.c.b16 %v392, %v390
  %v517 = vpack.c.b16 %v395, %v393
  %v518 = vpack.c.b16 %v396, %v394
  %v519 = vpack.c.b16 %v399, %v397
  %v520 = vpack.c.b16 %v400, %v398
  %v521 = vpack.c.b16 %v403, %v401
  %v522 = vpack.c.b16 %v404, %v402
  %v523 = vpack.c.b16 %v407, %v405
  %v524 = vpack.c.b16 %v408, %v406
  %v525 = vpack.c.b16 %v411, %v409
  %v526 = vpack.c.b16 %v412, %v410
  %v527 = vpack.c.b16 %v415, %v413
  %v528 = vpack.c.b16 %v416, %v414
  %v529 = vpack.c.b16 %v419, %v417
  %v530 = vpack.c.b16 %v420, %v418
  %v531 = vpack.c.b16 %v423, %v421
  %v532 = vpack.c.b16 %v424, %v422
  %v533 = vpack.c.b16 %v427, %v425
  %v534 = vpack.c.b16 %v428, %v426
  %v535 = vpack.c.b16 %v431, %v429
  %v536 = vpack.c.b16 %v432, %v430
  %v537 = vpack.c.b16 %v435, %v433
  %v538 = vpack.c.b16 %v436, %v434
  %v539 = vpack.c.b16 %v439, %v437
  %v540 = vpack.c.b16 %v440, %v438
  %v541 = vpack.c.b16 %v443, %v441
  %v542 = vpack.c.b16 %v444, %v442
  %v543 = vpack.c.b16 %v447, %v445
  %v544 = vpack.c.b16 %v448, %v446
  %641 = vmatprep.subr.bf16.mxu0 %v450
  %642 = vmatpush1.bf16.msra.mxu0 %v449
  %643 = vmatprep.subr.bf16.mxu0 %v452
  %644 = vmatpush1.bf16.msra.mxu0 %v451
  %645 = vmatprep.subr.bf16.mxu0 %v454
  %646 = vmatpush1.bf16.msra.mxu0 %v453
  %647 = vmatprep.subr.bf16.mxu0 %v456
  %648 = vmatpush1.bf16.msra.mxu0 %v455
  %649 = vmatprep.subr.bf16.mxu0 %v458
  %650 = vmatpush1.bf16.msra.mxu0 %v457
  %651 = vmatprep.subr.bf16.mxu0 %v460
  %652 = vmatpush1.bf16.msra.mxu0 %v459
  %653 = vmatprep.subr.bf16.mxu0 %v462
  %654 = vmatpush1.bf16.msra.mxu0 %v461
  %655 = vmatprep.subr.bf16.mxu0 %v464
  %656 = vmatpush1.bf16.msra.mxu0 %v463
  %657 = vmatprep.subr.bf16.mxu0 %v466
  %658 = vmatpush1.bf16.msra.mxu0 %v465
  %659 = vmatprep.subr.bf16.mxu0 %v468
  %660 = vmatpush1.bf16.msra.mxu0 %v467
  %661 = vmatprep.subr.bf16.mxu0 %v470
  %662 = vmatpush1.bf16.msra.mxu0 %v469
  %663 = vmatprep.subr.bf16.mxu0 %v472
  %664 = vmatpush1.bf16.msra.mxu0 %v471
  %665 = vmatprep.subr.bf16.mxu0 %v474
  %666 = vmatpush1.bf16.msra.mxu0 %v473
  %667 = vmatprep.subr.bf16.mxu0 %v476
  %668 = vmatpush1.bf16.msra.mxu0 %v475
  %669 = vmatprep.subr.bf16.mxu0 %v478
  %670 = vmatpush1.bf16.msra.mxu0 %v477
  %671 = vmatprep.subr.bf16.mxu0 %v480
  %672 = vmatpush1.bf16.msra.mxu0 %v479
  %673 = vmatprep.mubr.bf16.mxu0 %v150
  %674 = vmatmul.mubr.bf16.gmra.mrb[0].mxu0 %v149
  %v675 = vpop.f32.mrb[0].mxu0
  %v676 = vadd.f32 %v124, %v675
  %v677 = vpop.f32.mrb[0].mxu0
  %v678 = vadd.f32 %v128, %v677
  %v679 = vpop.f32.mrb[0].mxu0
  %v680 = vadd.f32 %v124, %v679
  %v681 = vpop.f32.mrb[0].mxu0
  %v682 = vadd.f32 %v128, %v681
  %683 = vdwg.mxu0
  %684 = vmatprep.subr.bf16.mxu0 %v482
  %685 = vmatpush1.bf16.msra.mxu0 %v481
  %686 = vmatprep.subr.bf16.mxu0 %v484
  %687 = vmatpush1.bf16.msra.mxu0 %v483
  %688 = vmatprep.subr.bf16.mxu0 %v486
  %689 = vmatpush1.bf16.msra.mxu0 %v485
  %690 = vmatprep.subr.bf16.mxu0 %v488
  %691 = vmatpush1.bf16.msra.mxu0 %v487
  %692 = vmatprep.subr.bf16.mxu0 %v490
  %693 = vmatpush1.bf16.msra.mxu0 %v489
  %694 = vmatprep.subr.bf16.mxu0 %v492
  %695 = vmatpush1.bf16.msra.mxu0 %v491
  %696 = vmatprep.subr.bf16.mxu0 %v494
  %697 = vmatpush1.bf16.msra.mxu0 %v493
  %698 = vmatprep.subr.bf16.mxu0 %v496
  %699 = vmatpush1.bf16.msra.mxu0 %v495
  %700 = vmatprep.subr.bf16.mxu0 %v498
  %701 = vmatpush1.bf16.msra.mxu0 %v497
  %702 = vmatprep.subr.bf16.mxu0 %v500
  %703 = vmatpush1.bf16.msra.mxu0 %v499
  %704 = vmatprep.subr.bf16.mxu0 %v502
  %705 = vmatpush1.bf16.msra.mxu0 %v501
  %706 = vmatprep.subr.bf16.mxu0 %v504
  %707 = vmatpush1.bf16.msra.mxu0 %v503
  %708 = vmatprep.subr.bf16.mxu0 %v506
  %709 = vmatpush1.bf16.msra.mxu0 %v505
  %710 = vmatprep.subr.bf16.mxu0 %v508
  %711 = vmatpush1.bf16.msra.mxu0 %v507
  %712 = vmatprep.subr.bf16.mxu0 %v510
  %713 = vmatpush1.bf16.msra.mxu0 %v509
  %714 = vmatprep.subr.bf16.mxu0 %v512
  %715 = vmatpush1.bf16.msra.mxu0 %v511
  %716 = vmatprep.mubr.bf16.mxu0 %v152
  %717 = vmatmul.mubr.bf16.gmra.mrb[0].mxu0 %v151
  %v718 = vpop.f32.mrb[0].mxu0
  %v719 = vadd.f32 %v676, %v718
  %v720 = vpop.f32.mrb[0].mxu0
  %v721 = vadd.f32 %v678, %v720
  %v722 = vpop.f32.mrb[0].mxu0
  %v723 = vadd.f32 %v680, %v722
  %v724 = vpop.f32.mrb[0].mxu0
  %v725 = vadd.f32 %v682, %v724
  %726 = vdwg.mxu0
  %727 = vmatprep.subr.bf16.mxu0 %v514
  %728 = vmatpush1.bf16.msra.mxu0 %v513
  %729 = vmatprep.subr.bf16.mxu0 %v516
  %730 = vmatpush1.bf16.msra.mxu0 %v515
  %731 = vmatprep.subr.bf16.mxu0 %v518
  %732 = vmatpush1.bf16.msra.mxu0 %v517
  %733 = vmatprep.subr.bf16.mxu0 %v520
  %734 = vmatpush1.bf16.msra.mxu0 %v519
  %735 = vmatprep.subr.bf16.mxu0 %v522
  %736 = vmatpush1.bf16.msra.mxu0 %v521
  %737 = vmatprep.subr.bf16.mxu0 %v524
  %738 = vmatpush1.bf16.msra.mxu0 %v523
  %739 = vmatprep.subr.bf16.mxu0 %v526
  %740 = vmatpush1.bf16.msra.mxu0 %v525
  %741 = vmatprep.subr.bf16.mxu0 %v528
  %742 = vmatpush1.bf16.msra.mxu0 %v527
  %743 = vmatprep.subr.bf16.mxu0 %v530
  %744 = vmatpush1.bf16.msra.mxu0 %v529
  %745 = vmatprep.subr.bf16.mxu0 %v532
  %746 = vmatpush1.bf16.msra.mxu0 %v531
  %747 = vmatprep.subr.bf16.mxu0 %v534
  %748 = vmatpush1.bf16.msra.mxu0 %v533
  %749 = vmatprep.subr.bf16.mxu0 %v536
  %750 = vmatpush1.bf16.msra.mxu0 %v535
  %751 = vmatprep.subr.bf16.mxu0 %v538
  %752 = vmatpush1.bf16.msra.mxu0 %v537
  %753 = vmatprep.subr.bf16.mxu0 %v540
  %754 = vmatpush1.bf16.msra.mxu0 %v539
  %755 = vmatprep.subr.bf16.mxu0 %v542
  %756 = vmatpush1.bf16.msra.mxu0 %v541
  %757 = vmatprep.subr.bf16.mxu0 %v544
  %758 = vmatpush1.bf16.msra.mxu0 %v543
  %759 = vmatprep.mubr.bf16.mxu0 %v154
  %760 = vmatmul.mubr.bf16.gmra.mrb[0].mxu0 %v153
  %v761 = vpop.f32.mrb[0].mxu0
  %v762 = vadd.f32 %v719, %v761
  %v763 = vpop.f32.mrb[0].mxu0
  %v764 = vadd.f32 %v721, %v763
  %v765 = vpop.f32.mrb[0].mxu0
  %v766 = vadd.f32 %v723, %v765
  %v767 = vpop.f32.mrb[0].mxu0
  %v768 = vadd.f32 %v725, %v767
  %769 = vdwg.mxu0
  %vm770 = vcmp.gt.f32.partialorder %v762, 0.0
  %vm771 = vcmp.gt.f32.partialorder %v764, 0.0
  %vm772 = vcmp.gt.f32.partialorder %v766, 0.0
  %vm773 = vcmp.gt.f32.partialorder %v768, 0.0
  %v774 = vmul.f32 %v762, 0.2
  %v775 = vmul.f32 %v764, 0.2
  %v776 = vmul.f32 %v766, 0.2
  %v777 = vmul.f32 %v768, 0.2
  %v778 = vsel %vm770, %v762, %v774
  %v779 = vsel %vm771, %v764, %v775
  %v780 = vsel %vm772, %v766, %v776
  %v781 = vsel %vm773, %v768, %v777
  %v782 = vld [vmem:[%s3] sm:$0x3]
  %v784 = vlaneseq
  %v785 = vshrl.u32 %v784, 7
  %v786 = vsub.s32 0, %v785
  %v787 = vrot.slane %v782, %v786
  %v788 = vlaneseq
  %v789 = vshrl.u32 %v788, 7
  %v790 = vsub.s32 1, %v789
  %v791 = vrot.slane %v782, %v790
  %v794 = vadd.f32 %v778, %v787
  %v795 = vadd.f32 %v779, %v791
  %v796 = vadd.f32 %v780, %v787
  %v797 = vadd.f32 %v781, %v791
  %v798 = vpack.c.bf16 %v796, %v794
  %v799 = vpack.c.bf16 %v797, %v795
  %v802 = vunpack.c.l.b16 %v798
  %v803 = vunpack.c.l.b16 %v799
  %v804 = vunpack.c.h.b16 %v798
  %v805 = vunpack.c.h.b16 %v799
  %v806 = vpack.c.b16 %v803, %v802
  %v807 = vpack.c.b16 %v805, %v804
  %810 = vst [vmem:[%s4] sm:$0xff] %v806
  %811 = vst [vmem:[%s4 + $0x8] sm:$0xff] %v807
  // Predicated region
  $region18: #{discriminator_forward.6} parent=0 // pred_check
    _
  $region19: #{discriminator_forward.6} parent=0 // pred_check_branch
    %813 = sbr.rel (0) target = $region21
  $region20: #{discriminator_forward.6} parent=0 // pred_region
    _
  $region21: #{discriminator_forward.6} parent=0 // pred_fallthru
    _
  // Predicated region
  $region22: #{discriminator_forward.6} parent=0 // pred_check
    _
  $region23: #{discriminator_forward.6} parent=0 // pred_check_branch
    %815 = sbr.rel (0) target = $region25
  $region24: #{discriminator_forward.6} parent=0 // pred_region
    _
  $region25: #{discriminator_forward.6} parent=0 // pred_fallthru
    _

// kernel: mul.41
$region0: #{mul.41}
  #allocation0 [shape = 's32[1]{0}', space=sflag, size = 0x4, scoped, tag = 'scoped memory for mul.41']
  %s0 = inlined_call_operand.vmem [shape: f32[64], index: 0, kind: input, shape index: {}]
  %s1 = inlined_call_operand.vmem [shape: f32[64], index: 1, kind: input, shape index: {}]
  %s2 = inlined_call_operand.vmem [shape: f32[64], index: 2, kind: output, shape index: {}]
  %v3 = vld [vmem:[%s0] sm:$0x1]
  %v4 = vld [vmem:[%s1] sm:$0x1]
  %5 = xla_tuple %v3, %v4
  %6 = xla_tuple %5
  %v7 = vmul.f32 %v3, %v4
  %8 = xla_tuple %v7
  %9 = vst [vmem:[%s2] sm:$0x1] %v7

// kernel: tile.63
$region0: #{tile.63}
  #allocation0 [shape = 's32[1]{0}', space=sflag, size = 0x4, scoped, tag = 'scoped memory for tile.63']
  %s0 = inlined_call_operand.vmem [shape: f32[64], index: 0, kind: input, shape index: {}]
  %s1 = inlined_call_operand.vmem [shape: f32[4,64], index: 1, kind: output, shape index: {}]
  // Predicated region
  $region2: #{tile.63} parent=0 // pred_check
    _
  $region3: #{tile.63} parent=0 // pred_check_branch
    %3 = sbr.rel (0) target = $region5
  $region4: #{tile.63} parent=0 // pred_region
    _
  $region5: #{tile.63} parent=0 // pred_fallthru
    _
  %v4 = vld [vmem:[%s0] ss:$0 sm:$0xff]
  %5 = vst [vmem:[%s1] sm:$0xf] %v4

// kernel: tile.64
$region0: #{tile.64}
  %s0 = inlined_call_operand.vmem [shape: f32[4,64], index: 0, kind: input, shape index: {}]
  %s1 = inlined_call_operand.vmem [shape: f32[1,256], index: 1, kind: output, shape index: {}]
  $region1: #{tile.64} parent=0
    #allocation0 [shape = 'u8[8192]{0}', space=vmem, size = 0x2000, scoped, tag = 'scoped mem for output reshape']
    #allocation1 [shape = 'u8[4096]{0}', space=vmem, size = 0x1000, scoped, tag = 'scoped mem for input reshape']
    %s3 = sshllo.u32 0, 4
    %v4 = vld [vmem:[%s0] sm:%s3]
    %5 = vst [vmem:[#allocation1] sm:%s3] %v4
    %s6 = smov 3
    %v7 = vld [vmem:[#allocation1] ss:$2 sm:%s6]
    %vm8 = vcmask 523264
    %9 = vst.msk [vmem:[#allocation0] ss:$8 sm:$0x3] %vm8, %v7
    %s10 = scalar_lea.vmem [#allocation1], 1
    %s11 = smov 3
    %v12 = vld [vmem:[%s10] ss:$2 sm:%s11]
    %13 = vrot.lane.b32.xlu0 %v12, 64
    %v14 = vpop.permute.xlu0 %13
    %vm15 = vcmask 1048064
    %16 = vst.msk [vmem:[#allocation0] ss:$8 sm:$0x3] %vm15, %v14
    %s18 = sshllo.u32 0, 1
    %v20 = vld [vmem:[#allocation0] sm:%s18]
    %s21 = sshllo.u32 0, 1
    %22 = vst [vmem:[%s1] sm:%s21] %v20
    %s23 = scalar_lea.vmem [#allocation0], 8
    %v24 = vld [vmem:[%s23] sm:%s18]
    %s25 = sshllo.u32 0, 1
    %s26 = scalar_lea.vmem %s1, 1
    %27 = vst [vmem:[%s26] sm:%s25] %v24

// kernel: mul.47
$region0: #{mul.47}
  #allocation0 [shape = 's32[1]{0}', space=sflag, size = 0x4, scoped, tag = 'scoped memory for mul.47']
  %s0 = inlined_call_operand.vmem [shape: f32[128], index: 0, kind: input, shape index: {}]
  %s1 = inlined_call_operand.vmem [shape: f32[128], index: 1, kind: input, shape index: {}]
  %s2 = inlined_call_operand.vmem [shape: f32[128], index: 2, kind: output, shape index: {}]
  %v3 = vld [vmem:[%s0] sm:$0x1]
  %v4 = vld [vmem:[%s1] sm:$0x1]
  %5 = xla_tuple %v3, %v4
  %6 = xla_tuple %5
  %v7 = vmul.f32 %v3, %v4
  %8 = xla_tuple %v7
  %9 = vst [vmem:[%s2] sm:$0x1] %v7

// kernel: tile.73
$region0: #{tile.73}
  #allocation0 [shape = 's32[1]{0}', space=sflag, size = 0x4, scoped, tag = 'scoped memory for tile.73']
  %s0 = inlined_call_operand.vmem [shape: f32[128], index: 0, kind: input, shape index: {}]
  %s1 = inlined_call_operand.vmem [shape: f32[2,128], index: 1, kind: output, shape index: {}]
  // Predicated region
  $region2: #{tile.73} parent=0 // pred_check
    _
  $region3: #{tile.73} parent=0 // pred_check_branch
    %3 = sbr.rel (0) target = $region5
  $region4: #{tile.73} parent=0 // pred_region
    _
  $region5: #{tile.73} parent=0 // pred_fallthru
    _
  %v4 = vld [vmem:[%s0] ss:$0 sm:$0xff]
  %5 = vst [vmem:[%s1] sm:$0x3] %v4

// kernel: discriminator_forward.9
$region0: #{discriminator_forward.9}
  #allocation0 [shape = 'u32[]', space=smem, size = 0x4, offset = 0x4, fixed_abs, tag = 'smem constant byte address 0x4 - core index']
  #allocation1 [shape = 'u32[144,128]{1,0:T(1,128)}', space=vmem, size = 0x12000, scoped, tag = 'internal scratch']
  %s0 = inlined_call_operand.vmem [shape: bf16[16,512], index: 0, kind: input, shape index: {}]
  %s1 = inlined_call_operand.vmem [shape: bf16[512,128], index: 1, kind: input, shape index: {}]
  %s2 = inlined_call_operand.vmem [shape: f32[1,128], index: 2, kind: input, shape index: {}]
  %s3 = inlined_call_operand.vmem [shape: f32[16,128], index: 3, kind: output, shape index: {}]
  %s4 = sld [smem:[#allocation0]]
  $region22: #{discriminator_forward.9} parent=0
    _
  %s6 = ssub.s32 1, %s4
  %s7 = scalar_select 0, %s6, %s4
  // Predicated region
  $region2: #{discriminator_forward.9} parent=0 // pred_check
    _
  $region3: #{discriminator_forward.9} parent=0 // pred_check_branch
    %9 = sbr.rel (0) target = $region5
  $region4: #{discriminator_forward.9} parent=0 // pred_region
    _
  $region5: #{discriminator_forward.9} parent=0 // pred_fallthru
    _
  // Predicated region
  $region6: #{discriminator_forward.9} parent=0 // pred_check
    _
  $region7: #{discriminator_forward.9} parent=0 // pred_check_branch
    %11 = sbr.rel (0) target = $region9
  $region8: #{discriminator_forward.9} parent=0 // pred_region
    _
  $region9: #{discriminator_forward.9} parent=0 // pred_fallthru
    _
  // Predicated region
  $region10: #{discriminator_forward.9} parent=0 // pred_check
    _
  $region11: #{discriminator_forward.9} parent=0 // pred_check_branch
    %13 = sbr.rel (0) target = $region13
  $region12: #{discriminator_forward.9} parent=0 // pred_region
    _
  $region13: #{discriminator_forward.9} parent=0 // pred_fallthru
    _
  %v15 = vld [vmem:[%s0] sm:$0xff]
  %v16 = vld [vmem:[%s0 + $0x8] sm:$0xff]
  %v17 = vld [vmem:[%s0 + $0x10] sm:$0xff]
  %v18 = vld [vmem:[%s0 + $0x18] sm:$0xff]
  %v19 = vld [vmem:[%s1] sm:$0xf]
  %v20 = vld [vmem:[%s1 + $0x4] sm:$0xf]
  %v21 = vld [vmem:[%s1 + $0x8] sm:$0xf]
  %v22 = vld [vmem:[%s1 + $0xc] sm:$0xf]
  %v23 = vld [vmem:[%s1 + $0x10] sm:$0xf]
  %v24 = vld [vmem:[%s1 + $0x14] sm:$0xf]
  %v25 = vld [vmem:[%s1 + $0x18] sm:$0xf]
  %v26 = vld [vmem:[%s1 + $0x1c] sm:$0xf]
  %v27 = vld [vmem:[%s1 + $0x20] sm:$0xf]
  %v28 = vld [vmem:[%s1 + $0x24] sm:$0xf]
  %v29 = vld [vmem:[%s1 + $0x28] sm:$0xf]
  %v30 = vld [vmem:[%s1 + $0x2c] sm:$0xf]
  %v31 = vld [vmem:[%s1 + $0x30] sm:$0xf]
  %v32 = vld [vmem:[%s1 + $0x34] sm:$0xf]
  %v33 = vld [vmem:[%s1 + $0x38] sm:$0xf]
  %v34 = vld [vmem:[%s1 + $0x3c] sm:$0xf]
  %v35 = vld [vmem:[%s1 + $0x40] sm:$0xf]
  %v36 = vld [vmem:[%s1 + $0x44] sm:$0xf]
  %v37 = vld [vmem:[%s1 + $0x48] sm:$0xf]
  %v38 = vld [vmem:[%s1 + $0x4c] sm:$0xf]
  %v39 = vld [vmem:[%s1 + $0x50] sm:$0xf]
  %v40 = vld [vmem:[%s1 + $0x54] sm:$0xf]
  %v41 = vld [vmem:[%s1 + $0x58] sm:$0xf]
  %v42 = vld [vmem:[%s1 + $0x5c] sm:$0xf]
  %v43 = vld [vmem:[%s1 + $0x60] sm:$0xf]
  %v44 = vld [vmem:[%s1 + $0x64] sm:$0xf]
  %v45 = vld [vmem:[%s1 + $0x68] sm:$0xf]
  %v46 = vld [vmem:[%s1 + $0x6c] sm:$0xf]
  %v47 = vld [vmem:[%s1 + $0x70] sm:$0xf]
  %v48 = vld [vmem:[%s1 + $0x74] sm:$0xf]
  %v49 = vld [vmem:[%s1 + $0x78] sm:$0xf]
  %v50 = vld [vmem:[%s1 + $0x7c] sm:$0xf]
  %v51 = vld [vmem:[%s1 + $0x80] sm:$0xf]
  %v52 = vld [vmem:[%s1 + $0x84] sm:$0xf]
  %v53 = vld [vmem:[%s1 + $0x88] sm:$0xf]
  %v54 = vld [vmem:[%s1 + $0x8c] sm:$0xf]
  %v55 = vld [vmem:[%s1 + $0x90] sm:$0xf]
  %v56 = vld [vmem:[%s1 + $0x94] sm:$0xf]
  %v57 = vld [vmem:[%s1 + $0x98] sm:$0xf]
  %v58 = vld [vmem:[%s1 + $0x9c] sm:$0xf]
  %v59 = vld [vmem:[%s1 + $0xa0] sm:$0xf]
  %v60 = vld [vmem:[%s1 + $0xa4] sm:$0xf]
  %v61 = vld [vmem:[%s1 + $0xa8] sm:$0xf]
  %v62 = vld [vmem:[%s1 + $0xac] sm:$0xf]
  %v63 = vld [vmem:[%s1 + $0xb0] sm:$0xf]
  %v64 = vld [vmem:[%s1 + $0xb4] sm:$0xf]
  %v65 = vld [vmem:[%s1 + $0xb8] sm:$0xf]
  %v66 = vld [vmem:[%s1 + $0xbc] sm:$0xf]
  %v67 = vld [vmem:[%s1 + $0xc0] sm:$0xf]
  %v68 = vld [vmem:[%s1 + $0xc4] sm:$0xf]
  %v69 = vld [vmem:[%s1 + $0xc8] sm:$0xf]
  %v70 = vld [vmem:[%s1 + $0xcc] sm:$0xf]
  %v71 = vld [vmem:[%s1 + $0xd0] sm:$0xf]
  %v72 = vld [vmem:[%s1 + $0xd4] sm:$0xf]
  %v73 = vld [vmem:[%s1 + $0xd8] sm:$0xf]
  %v74 = vld [vmem:[%s1 + $0xdc] sm:$0xf]
  %v75 = vld [vmem:[%s1 + $0xe0] sm:$0xf]
  %v76 = vld [vmem:[%s1 + $0xe4] sm:$0xf]
  %v77 = vld [vmem:[%s1 + $0xe8] sm:$0xf]
  %v78 = vld [vmem:[%s1 + $0xec] sm:$0xf]
  %v79 = vld [vmem:[%s1 + $0xf0] sm:$0xf]
  %v80 = vld [vmem:[%s1 + $0xf4] sm:$0xf]
  %v81 = vld [vmem:[%s1 + $0xf8] sm:$0xf]
  %v82 = vld [vmem:[%s1 + $0xfc] sm:$0xf]
  %v83 = vld [vmem:[%s2] sm:$0x1]
  %v85 = vlaneseq
  %v86 = vshrl.u32 %v85, 7
  %v87 = vsub.s32 0, %v86
  %v88 = vrot.slane %v83, %v87
  %v94 = vunpack.c.l.b16 %v15
  %v95 = vunpack.c.h.b16 %v15
  %v96 = vunpack.c.l.b16 %v16
  %v97 = vunpack.c.h.b16 %v16
  %v98 = vunpack.c.l.b16 %v17
  %v99 = vunpack.c.h.b16 %v17
  %v100 = vunpack.c.l.b16 %v18
  %v101 = vunpack.c.h.b16 %v18
  %v102 = vpack.c.b16 %v98, %v94
  %v103 = vpack.c.b16 %v99, %v95
  %v104 = vpack.c.b16 %v100, %v96
  %v105 = vpack.c.b16 %v101, %v97
  %v174 = vunpack.c.l.b16 %v19
  %v175 = vunpack.c.l.b16 %v20
  %v176 = vunpack.c.l.b16 %v21
  %v177 = vunpack.c.l.b16 %v22
  %v178 = vunpack.c.l.b16 %v23
  %v179 = vunpack.c.l.b16 %v24
  %v180 = vunpack.c.l.b16 %v25
  %v181 = vunpack.c.l.b16 %v26
  %v182 = vunpack.c.l.b16 %v27
  %v183 = vunpack.c.l.b16 %v28
  %v184 = vunpack.c.l.b16 %v29
  %v185 = vunpack.c.l.b16 %v30
  %v186 = vunpack.c.l.b16 %v31
  %v187 = vunpack.c.l.b16 %v32
  %v188 = vunpack.c.l.b16 %v33
  %v189 = vunpack.c.l.b16 %v34
  %v190 = vunpack.c.l.b16 %v35
  %v191 = vunpack.c.l.b16 %v36
  %v192 = vunpack.c.l.b16 %v37
  %v193 = vunpack.c.l.b16 %v38
  %v194 = vunpack.c.l.b16 %v39
  %v195 = vunpack.c.l.b16 %v40
  %v196 = vunpack.c.l.b16 %v41
  %v197 = vunpack.c.l.b16 %v42
  %v198 = vunpack.c.l.b16 %v43
  %v199 = vunpack.c.l.b16 %v44
  %v200 = vunpack.c.l.b16 %v45
  %v201 = vunpack.c.l.b16 %v46
  %v202 = vunpack.c.l.b16 %v47
  %v203 = vunpack.c.l.b16 %v48
  %v204 = vunpack.c.l.b16 %v49
  %v205 = vunpack.c.l.b16 %v50
  %v206 = vunpack.c.l.b16 %v51
  %v207 = vunpack.c.l.b16 %v52
  %v208 = vunpack.c.l.b16 %v53
  %v209 = vunpack.c.l.b16 %v54
  %v210 = vunpack.c.l.b16 %v55
  %v211 = vunpack.c.l.b16 %v56
  %v212 = vunpack.c.l.b16 %v57
  %v213 = vunpack.c.l.b16 %v58
  %v214 = vunpack.c.l.b16 %v59
  %v215 = vunpack.c.l.b16 %v60
  %v216 = vunpack.c.l.b16 %v61
  %v217 = vunpack.c.l.b16 %v62
  %v218 = vunpack.c.l.b16 %v63
  %v219 = vunpack.c.l.b16 %v64
  %v220 = vunpack.c.l.b16 %v65
  %v221 = vunpack.c.l.b16 %v66
  %v222 = vunpack.c.l.b16 %v67
  %v223 = vunpack.c.l.b16 %v68
  %v224 = vunpack.c.l.b16 %v69
  %v225 = vunpack.c.l.b16 %v70
  %v226 = vunpack.c.l.b16 %v71
  %v227 = vunpack.c.l.b16 %v72
  %v228 = vunpack.c.l.b16 %v73
  %v229 = vunpack.c.l.b16 %v74
  %v230 = vunpack.c.l.b16 %v75
  %v231 = vunpack.c.l.b16 %v76
  %v232 = vunpack.c.l.b16 %v77
  %v233 = vunpack.c.l.b16 %v78
  %v234 = vunpack.c.l.b16 %v79
  %v235 = vunpack.c.l.b16 %v80
  %v236 = vunpack.c.l.b16 %v81
  %v237 = vunpack.c.l.b16 %v82
  %v238 = vpack.c.b16 %v175, %v174
  %v239 = vpack.c.b16 %v177, %v176
  %v240 = vpack.c.b16 %v179, %v178
  %v241 = vpack.c.b16 %v181, %v180
  %v242 = vpack.c.b16 %v183, %v182
  %v243 = vpack.c.b16 %v185, %v184
  %v244 = vpack.c.b16 %v187, %v186
  %v245 = vpack.c.b16 %v189, %v188
  %v246 = vpack.c.b16 %v191, %v190
  %v247 = vpack.c.b16 %v193, %v192
  %v248 = vpack.c.b16 %v195, %v194
  %v249 = vpack.c.b16 %v197, %v196
  %v250 = vpack.c.b16 %v199, %v198
  %v251 = vpack.c.b16 %v201, %v200
  %v252 = vpack.c.b16 %v203, %v202
  %v253 = vpack.c.b16 %v205, %v204
  %v254 = vpack.c.b16 %v207, %v206
  %v255 = vpack.c.b16 %v209, %v208
  %v256 = vpack.c.b16 %v211, %v210
  %v257 = vpack.c.b16 %v213, %v212
  %v258 = vpack.c.b16 %v215, %v214
  %v259 = vpack.c.b16 %v217, %v216
  %v260 = vpack.c.b16 %v219, %v218
  %v261 = vpack.c.b16 %v221, %v220
  %v262 = vpack.c.b16 %v223, %v222
  %v263 = vpack.c.b16 %v225, %v224
  %v264 = vpack.c.b16 %v227, %v226
  %v265 = vpack.c.b16 %v229, %v228
  %v266 = vpack.c.b16 %v231, %v230
  %v267 = vpack.c.b16 %v233, %v232
  %v268 = vpack.c.b16 %v235, %v234
  %v269 = vpack.c.b16 %v237, %v236
  %302 = vmatprep.subr.bf16.mxu0 0
  %303 = vmatpush1.bf16.msra.mxu0 %v238
  %304 = vmatprep.subr.bf16.mxu0 0
  %305 = vmatpush1.bf16.msra.mxu0 %v239
  %306 = vmatprep.subr.bf16.mxu0 0
  %307 = vmatpush1.bf16.msra.mxu0 %v240
  %308 = vmatprep.subr.bf16.mxu0 0
  %309 = vmatpush1.bf16.msra.mxu0 %v241
  %310 = vmatprep.subr.bf16.mxu0 0
  %311 = vmatpush1.bf16.msra.mxu0 %v242
  %312 = vmatprep.subr.bf16.mxu0 0
  %313 = vmatpush1.bf16.msra.mxu0 %v243
  %314 = vmatprep.subr.bf16.mxu0 0
  %315 = vmatpush1.bf16.msra.mxu0 %v244
  %316 = vmatprep.subr.bf16.mxu0 0
  %317 = vmatpush1.bf16.msra.mxu0 %v245
  %318 = vmatprep.subr.bf16.mxu0 0
  %319 = vmatpush1.bf16.msra.mxu0 %v246
  %320 = vmatprep.subr.bf16.mxu0 0
  %321 = vmatpush1.bf16.msra.mxu0 %v247
  %322 = vmatprep.subr.bf16.mxu0 0
  %323 = vmatpush1.bf16.msra.mxu0 %v248
  %324 = vmatprep.subr.bf16.mxu0 0
  %325 = vmatpush1.bf16.msra.mxu0 %v249
  %326 = vmatprep.subr.bf16.mxu0 0
  %327 = vmatpush1.bf16.msra.mxu0 %v250
  %328 = vmatprep.subr.bf16.mxu0 0
  %329 = vmatpush1.bf16.msra.mxu0 %v251
  %330 = vmatprep.subr.bf16.mxu0 0
  %331 = vmatpush1.bf16.msra.mxu0 %v252
  %332 = vmatprep.subr.bf16.mxu0 0
  %333 = vmatpush1.bf16.msra.mxu0 %v253
  %334 = vmatprep.mubr.bf16.mxu0 %v103
  %335 = vmatmul.mubr.bf16.gmra.mrb[0].mxu0 %v102
  %v336 = vpop.f32.mrb[0].mxu0
  %v337 = vadd.f32 %v88, %v336
  %v338 = vpop.f32.mrb[0].mxu0
  %v339 = vpop.f32.mrb[0].mxu0
  %v340 = vadd.f32 %v88, %v339
  %v341 = vpop.f32.mrb[0].mxu0
  %342 = vdwg.mxu0
  %343 = vmatprep.subr.bf16.mxu0 0
  %344 = vmatpush1.bf16.msra.mxu0 %v254
  %345 = vmatprep.subr.bf16.mxu0 0
  %346 = vmatpush1.bf16.msra.mxu0 %v255
  %347 = vmatprep.subr.bf16.mxu0 0
  %348 = vmatpush1.bf16.msra.mxu0 %v256
  %349 = vmatprep.subr.bf16.mxu0 0
  %350 = vmatpush1.bf16.msra.mxu0 %v257
  %351 = vmatprep.subr.bf16.mxu0 0
  %352 = vmatpush1.bf16.msra.mxu0 %v258
  %353 = vmatprep.subr.bf16.mxu0 0
  %354 = vmatpush1.bf16.msra.mxu0 %v259
  %355 = vmatprep.subr.bf16.mxu0 0
  %356 = vmatpush1.bf16.msra.mxu0 %v260
  %357 = vmatprep.subr.bf16.mxu0 0
  %358 = vmatpush1.bf16.msra.mxu0 %v261
  %359 = vmatprep.subr.bf16.mxu0 0
  %360 = vmatpush1.bf16.msra.mxu0 %v262
  %361 = vmatprep.subr.bf16.mxu0 0
  %362 = vmatpush1.bf16.msra.mxu0 %v263
  %363 = vmatprep.subr.bf16.mxu0 0
  %364 = vmatpush1.bf16.msra.mxu0 %v264
  %365 = vmatprep.subr.bf16.mxu0 0
  %366 = vmatpush1.bf16.msra.mxu0 %v265
  %367 = vmatprep.subr.bf16.mxu0 0
  %368 = vmatpush1.bf16.msra.mxu0 %v266
  %369 = vmatprep.subr.bf16.mxu0 0
  %370 = vmatpush1.bf16.msra.mxu0 %v267
  %371 = vmatprep.subr.bf16.mxu0 0
  %372 = vmatpush1.bf16.msra.mxu0 %v268
  %373 = vmatprep.subr.bf16.mxu0 0
  %374 = vmatpush1.bf16.msra.mxu0 %v269
  %375 = vmatprep.mubr.bf16.mxu0 %v105
  %376 = vmatmul.mubr.bf16.gmra.mrb[0].mxu0 %v104
  %v377 = vpop.f32.mrb[0].mxu0
  %v378 = vadd.f32 %v337, %v377
  %v379 = vpop.f32.mrb[0].mxu0
  %v380 = vpop.f32.mrb[0].mxu0
  %v381 = vadd.f32 %v340, %v380
  %v382 = vpop.f32.mrb[0].mxu0
  %383 = vdwg.mxu0
  %v384 = vlaneseq
  %v385 = vand.u32 %v384, 127
  %vm386 = vcmp.ge.s32.totalorder %v385, 1
  %vm387 = vcmp.lt.s32.totalorder %v385, 11
  %vm388 = vmand %vm386, %vm387
  %v389 = vsub.f32 0.0, %v378
  %v390 = vsub.f32 0.0, %v381
  %v391 = vmul.f32 %v389, 1.442695
  %v392 = vpow.pop %v391
  %v393 = vmul.f32 %v390, 1.442695
  %v394 = vpow.pop %v393
  %v395 = vadd.f32 %v392, 1.0
  %v396 = vadd.f32 %v394, 1.0
  %v397 = vrcp.pop %v395
  %v398 = vrcp.pop %v396
  %v399 = vmax.f32 %v397, 0.0
  %v400 = vmax.f32 %v398, 0.0
  %v401 = vmin.f32 %v399, 1.0
  %v402 = vmin.f32 %v400, 1.0
  %v403 = vsel %vm388, %v378, -1e+30
  %v404 = vsel %vm388, %v381, -1e+30
  %405 = vmax.xlane.f32.xlu0 %v403
  %v406 = vpop.xlane.xlu0 %405
  %407 = vmax.xlane.f32.xlu0 %v404
  %v408 = vpop.xlane.xlu0 %407
  %v409 = vsub.f32 %v403, %v406
  %v410 = vsub.f32 %v404, %v408
  %v411 = vmul.f32 %v409, 1.442695
  %v412 = vpow.pop %v411
  %v413 = vmul.f32 %v410, 1.442695
  %v414 = vpow.pop %v413
  %415 = vadd.xlane.f32.xlu0 %v412
  %v416 = vpop.xlane.xlu0 %415
  %417 = vadd.xlane.f32.xlu0 %v414
  %v418 = vpop.xlane.xlu0 %417
  %v419 = vrcp.pop %v416
  %v420 = vmul.f32 %v412, %v419
  %v421 = vrcp.pop %v418
  %v422 = vmul.f32 %v414, %v421
  %vm423 = vcmp.eq.s32.totalorder %v385, 0
  %v424 = vsel %vm388, %v420, 0.0
  %v425 = vsel %vm388, %v422, 0.0
  %v426 = vsel %vm423, %v401, %v424
  %v427 = vsel %vm423, %v402, %v425
  %428 = vst [vmem:[%s3] sm:$0xff] %v426
  %429 = vst [vmem:[%s3 + $0x8] sm:$0xff] %v427
  // Predicated region
  $region14: #{discriminator_forward.9} parent=0 // pred_check
    _
  $region15: #{discriminator_forward.9} parent=0 // pred_check_branch
    %431 = sbr.rel (0) target = $region17
  $region16: #{discriminator_forward.9} parent=0 // pred_region
    _
  $region17: #{discriminator_forward.9} parent=0 // pred_fallthru
    _
  // Predicated region
  $region18: #{discriminator_forward.9} parent=0 // pred_check
    _
  $region19: #{discriminator_forward.9} parent=0 // pred_check_branch
    %433 = sbr.rel (0) target = $region21
  $region20: #{discriminator_forward.9} parent=0 // pred_region
    _
  $region21: #{discriminator_forward.9} parent=0 // pred_fallthru
    _

</llo_original>
